<compile_context>
chip_gen: v5e
topology: v5e:2x2
jax: 0.10.0
libtpu: 0.0.40
codegen_flags: <defaults>
</compile_context>

<pallas_src>
import math

import jax
import jax.numpy as jnp
from jax.experimental import pallas as pl
from jax.experimental.pallas import tpu as pltpu

_INV_SQRT2 = 1.0 / math.sqrt(2.0)

# VMEM budgets chosen to be safe on v7x (64 MiB physical) as well as v5e/v6e.
_VMEM_BUDGET_BYTES = 40 * 1024 * 1024
_VMEM_LIMIT_BYTES = 48 * 1024 * 1024


def _round_up(a, b):
    return ((a + b - 1) // b) * b


def _mlp_kernel(x_ref, w1_ref, w2_ref, o_ref, acc_ref):
    # x_ref:  (tm, C)  bf16 row tile (k-invariant -> DMA'd once per row tile)
    # w1_ref: (C, th)  bf16 slice of c_fc.weight.T
    # w2_ref: (th, C)  bf16 slice of c_proj.weight.T
    # acc_ref:(tm, C)  f32 accumulator scratch (resident across the k axis)
    k = pl.program_id(1)

    # First matmul on the MXU (bf16 in, f32 accumulate).
    h = jnp.dot(x_ref[...], w1_ref[...], preferred_element_type=jnp.float32)
    # Exact GELU (erf formulation == nn.GELU default), in f32 (EUP handles erf).
    h = 0.5 * h * (1.0 + jax.lax.erf(h * _INV_SQRT2))
    # Second matmul; GELU is elementwise over the hidden dim, so per-slice
    # gelu(x @ W1_k) @ W2_k sums to the full result.
    prod = jnp.dot(h.astype(w2_ref.dtype), w2_ref[...],
                   preferred_element_type=jnp.float32)

    # Write on the first k step (skips a zero-init pass), accumulate after.
    @pl.when(k == 0)
    def _():
        acc_ref[...] = prod

    @pl.when(k > 0)
    def _():
        acc_ref[...] += prod

    @pl.when(k == pl.num_programs(1) - 1)
    def _():
        o_ref[...] = acc_ref[...].astype(o_ref.dtype)


def prepare_mlp_params(w_fc, w_proj, dtype=jnp.bfloat16):
    """Hoist weight transposes + MXU cast out of the forward path.

    w_fc:   (4C, C) torch nn.Linear layout (out_features, in_features)
    w_proj: (C, 4C) torch nn.Linear layout
    Returns (w1, w2) with shapes (C, 4C) and (4C, C) in `dtype`.
    """
    w1 = jnp.asarray(w_fc, dtype=dtype).T
    w2 = jnp.asarray(w_proj, dtype=dtype).T
    return w1, w2


def _pick_tiles(M, C, H, tm, th, compute_itemsize, out_itemsize):
    # Row tile: default 256, shrink for tiny inputs; always a multiple of 8.
    if tm is None:
        tm = 256
    tm = min(tm, _round_up(M, 8))
    tm = _round_up(tm, 8)

    # Hidden tile: largest "nice" multiple of 128 that divides H.
    if th is None:
        for cand in (2048, 1536, 1024, 768, 512, 384, 256, 128):
            if H % cand == 0:
                th = cand
                break
        else:
            th = H
    assert H % th == 0, "th must divide the hidden dimension"

    def est(tm_, th_):
        return (2 * tm_ * C * compute_itemsize      # x tile (double-buffered)
                + 2 * C * th_ * compute_itemsize    # w1 slice (double-buffered)
                + 2 * th_ * C * compute_itemsize    # w2 slice (double-buffered)
                + 2 * tm_ * C * out_itemsize        # out tile (double-buffered)
                + tm_ * C * 4)                      # f32 accumulator

    # Shrink th, then tm, until the working set fits the v7x-safe budget.
    while est(tm, th) > _VMEM_BUDGET_BYTES and th > 128 and th % 2 == 0:
        th //= 2
    while est(tm, th) > _VMEM_BUDGET_BYTES and tm > 8:
        tm = max(8, _round_up(tm // 2, 8))
    return tm, th


def mlp_forward(x, w1, w2, *, tm=None, th=None):
    """x: (B, T, C); w1: (C, H) bf16; w2: (H, C) bf16 (from prepare_mlp_params)."""
    B, T, C = x.shape
    Cw, H = w1.shape
    assert Cw == C and w2.shape == (H, C)
    assert C % 128 == 0, "n_embd must be a multiple of 128 (lane width)"

    M = B * T
    compute_dtype = w1.dtype
    out_dtype = x.dtype
    tm, th = _pick_tiles(M, C, H, tm, th,
                         jnp.dtype(compute_dtype).itemsize,
                         jnp.dtype(out_dtype).itemsize)

    # Flatten and pad rows to a multiple of tm (zero rows -> zero outputs).
    x2d = x.reshape(M, C).astype(compute_dtype)
    M_pad = _round_up(M, tm)
    if M_pad != M:
        x2d = jnp.pad(x2d, ((0, M_pad - M), (0, 0)))

    out2d = pl.pallas_call(
        _mlp_kernel,
        out_shape=jax.ShapeDtypeStruct((M_pad, C), out_dtype),
        grid_spec=pltpu.PrefetchScalarGridSpec(
            num_scalar_prefetch=0,
            grid=(M_pad // tm, H // th),
            in_specs=[
                pl.BlockSpec((tm, C), lambda i, k: (i, 0)),   # x rows (k-invariant)
                pl.BlockSpec((C, th), lambda i, k: (0, k)),   # W1 hidden slice
                pl.BlockSpec((th, C), lambda i, k: (k, 0)),   # W2 hidden slice
            ],
            out_specs=pl.BlockSpec((tm, C), lambda i, k: (i, 0)),
            scratch_shapes=[pltpu.VMEM((tm, C), jnp.float32)],
        ),
        compiler_params=pltpu.CompilerParams(
            dimension_semantics=("parallel", "arbitrary"),
            vmem_limit_bytes=_VMEM_LIMIT_BYTES,
        ),
    )(x2d, w1, w2)

    return out2d[:M].reshape(B, T, C)


def mlp_reference(x, w_fc, w_proj):
    """Pure-JAX f32 reference matching the PyTorch module."""
    h = jnp.einsum("btc,hc->bth", x, w_fc)
    h = 0.5 * h * (1.0 + jax.lax.erf(h * _INV_SQRT2))
    return jnp.einsum("bth,ch->btc", h, w_proj)


if __name__ == "__main__":
    # Small config consistent with the module (n_embd multiple of 128).
    n_embd = 256
    hidden = 4 * n_embd
    B, T = 2, 8

    key = jax.random.PRNGKey(0)
    kx, kfc, kproj, kx2 = jax.random.split(key, 4)

    x = jax.random.normal(kx, (B, T, n_embd), dtype=jnp.float32)
    # nn.Linear weights: (out_features, in_features), bias=False.
    w_fc = jax.random.normal(kfc, (hidden, n_embd), dtype=jnp.float32) * 0.02
    w_proj = jax.random.normal(kproj, (n_embd, hidden), dtype=jnp.float32) * 0.02

    # Weight prep (transpose + bf16 cast) hoisted out of the forward path.
    w1, w2 = prepare_mlp_params(w_fc, w_proj)
    fwd = jax.jit(mlp_forward)

    out = jax.block_until_ready(fwd(x, w1, w2))
    ref = mlp_reference(x, w_fc, w_proj)
    assert out.shape == (B, T, n_embd)
    # bf16 MXU operands -> loosened tolerance vs the f32 reference.
    assert jnp.allclose(out, ref, atol=2e-2, rtol=2e-2), "mismatch vs reference"

    # Second shape with a row count that does not divide the tile (tail/pad path).
    x_odd = jax.random.normal(kx2, (2, 5, n_embd), dtype=jnp.float32)
    out_odd = jax.block_until_ready(fwd(x_odd, w1, w2))
    ref_odd = mlp_reference(x_odd, w_fc, w_proj)
    assert out_odd.shape == (2, 5, n_embd)
    assert jnp.allclose(out_odd, ref_odd, atol=2e-2, rtol=2e-2), "mismatch (tail)"

    # Force a small hidden tile so the multi-step reduction / accumulation
    # path (k > 0) is exercised even at this tiny config.
    fwd_multi_k = jax.jit(lambda a, b, c: mlp_forward(a, b, c, th=256))
    out_mk = jax.block_until_ready(fwd_multi_k(x, w1, w2))
    assert jnp.allclose(out_mk, ref, atol=2e-2, rtol=2e-2), "mismatch (multi-k)"

    # TODO(synk): dropout with p > 0 (training mode) would need pltpu.prng_*;
    # config.dropout == 0.0 so it is an identity here.
    print("KERNEL_OK")
</pallas_src>

<mosaic_0001>
module attributes {stable_mosaic.version = 11 : i64} {
  func.func @_mlp_kernel(%arg0: i32, %arg1: i32, %arg2: memref<16x256xbf16, #tpu.memory_space<vmem>>, %arg3: memref<256x1024xbf16, #tpu.memory_space<vmem>>, %arg4: memref<1024x256xbf16, #tpu.memory_space<vmem>>, %arg5: memref<16x256xf32, #tpu.memory_space<vmem>>, %arg6: memref<16x256xf32, #tpu.memory_space<vmem>>) attributes {dimension_semantics = [#tpu.dimension_semantics<parallel>, #tpu.dimension_semantics<arbitrary>], iteration_bounds = array<i64: 1, 1>, scalar_prefetch = 0 : i64, scratch_operands = 1 : i64, tpu.core_type = #tpu.core_type<tc>, window_params = [{transform_indices = @transform_0, window_bounds = array<i64: 16, 256>}, {transform_indices = @transform_1, window_bounds = array<i64: 256, 1024>}, {transform_indices = @transform_2, window_bounds = array<i64: 1024, 256>}, {transform_indices = @transform_3, window_bounds = array<i64: 16, 256>}]} {
    %c0 = arith.constant 0 : index
    %c0_0 = arith.constant 0 : index
    %0 = vector.load %arg2[%c0, %c0_0] : memref<16x256xbf16, #tpu.memory_space<vmem>>, vector<16x256xbf16>
    %c0_1 = arith.constant 0 : index
    %c0_2 = arith.constant 0 : index
    %1 = vector.load %arg3[%c0_1, %c0_2] : memref<256x1024xbf16, #tpu.memory_space<vmem>>, vector<256x1024xbf16>
    %cst = arith.constant dense<0.000000e+00> : vector<16x1024xf32>
    %2 = tpu.matmul %0, %1, %cst {dimension_numbers = #tpu.dot_dimension_numbers<[1], [0], [0], [1], [0, 0, 1, 1], [], []>} : vector<16x256xbf16>, vector<256x1024xbf16>, vector<16x1024xf32> -> vector<16x1024xf32>
    %cst_3 = arith.constant 5.000000e-01 : f32
    %3 = vector.broadcast %cst_3 : f32 to vector<16x1024xf32>
    %4 = arith.mulf %3, %2 : vector<16x1024xf32>
    %cst_4 = arith.constant 0.707106769 : f32
    %5 = vector.broadcast %cst_4 : f32 to vector<16x1024xf32>
    %6 = arith.mulf %2, %5 : vector<16x1024xf32>
    %7 = math.erf %6 : vector<16x1024xf32>
    %cst_5 = arith.constant 1.000000e+00 : f32
    %8 = vector.broadcast %cst_5 : f32 to vector<16x1024xf32>
    %9 = arith.addf %8, %7 : vector<16x1024xf32>
    %10 = arith.mulf %4, %9 : vector<16x1024xf32>
    %11 = arith.truncf %10 : vector<16x1024xf32> to vector<16x1024xbf16>
    %c0_6 = arith.constant 0 : index
    %c0_7 = arith.constant 0 : index
    %12 = vector.load %arg4[%c0_6, %c0_7] : memref<1024x256xbf16, #tpu.memory_space<vmem>>, vector<1024x256xbf16>
    %cst_8 = arith.constant dense<0.000000e+00> : vector<16x256xf32>
    %13 = tpu.matmul %11, %12, %cst_8 {dimension_numbers = #tpu.dot_dimension_numbers<[1], [0], [0], [1], [0, 0, 1, 1], [], []>} : vector<16x1024xbf16>, vector<1024x256xbf16>, vector<16x256xf32> -> vector<16x256xf32>
    %c0_i32 = arith.constant 0 : i32
    %14 = arith.cmpi eq, %arg1, %c0_i32 : i32
    %15 = arith.extui %14 : i1 to i32
    %c0_i32_9 = arith.constant 0 : i32
    %16 = arith.cmpi ne, %15, %c0_i32_9 : i32
    scf.if %16 {
      %c0_14 = arith.constant 0 : index
      %c0_15 = arith.constant 0 : index
      %23 = vector.load %arg6[%c0_14, %c0_15] : memref<16x256xf32, #tpu.memory_space<vmem>>, vector<16x256xf32>
      tpu.vector_store %arg6[%c0_14, %c0_15], %13 {strides = array<i32>} : memref<16x256xf32, #tpu.memory_space<vmem>>, vector<16x256xf32>,
    } else {
    }
    %c0_i32_10 = arith.constant 0 : i32
    %17 = arith.cmpi sgt, %arg1, %c0_i32_10 : i32
    %18 = arith.extui %17 : i1 to i32
    %c0_i32_11 = arith.constant 0 : i32
    %19 = arith.cmpi ne, %18, %c0_i32_11 : i32
    scf.if %19 {
      %c0_14 = arith.constant 0 : index
      %c0_15 = arith.constant 0 : index
      %23 = vector.load %arg6[%c0_14, %c0_15] : memref<16x256xf32, #tpu.memory_space<vmem>>, vector<16x256xf32>
      %24 = arith.addf %23, %13 : vector<16x256xf32>
      %c0_16 = arith.constant 0 : index
      %c0_17 = arith.constant 0 : index
      %25 = vector.load %arg6[%c0_16, %c0_17] : memref<16x256xf32, #tpu.memory_space<vmem>>, vector<16x256xf32>
      tpu.vector_store %arg6[%c0_16, %c0_17], %24 {strides = array<i32>} : memref<16x256xf32, #tpu.memory_space<vmem>>, vector<16x256xf32>,
    } else {
    }
    %c0_i32_12 = arith.constant 0 : i32
    %20 = arith.cmpi eq, %arg1, %c0_i32_12 : i32
    %21 = arith.extui %20 : i1 to i32
    %c0_i32_13 = arith.constant 0 : i32
    %22 = arith.cmpi ne, %21, %c0_i32_13 : i32
    scf.if %22 {
      %c0_14 = arith.constant 0 : index
      %c0_15 = arith.constant 0 : index
      %23 = vector.load %arg6[%c0_14, %c0_15] : memref<16x256xf32, #tpu.memory_space<vmem>>, vector<16x256xf32>
      %c0_16 = arith.constant 0 : index
      %c0_17 = arith.constant 0 : index
      %24 = vector.load %arg5[%c0_16, %c0_17] : memref<16x256xf32, #tpu.memory_space<vmem>>, vector<16x256xf32>
      tpu.vector_store %arg5[%c0_16, %c0_17], %23 {strides = array<i32>} : memref<16x256xf32, #tpu.memory_space<vmem>>, vector<16x256xf32>,
    } else {
    }
    return
  }
  func.func @transform_0(%arg0: i32, %arg1: i32) -> (i32, i32) {
    %c0_i32 = arith.constant 0 : i32
    %c0_i32_0 = arith.constant 0 : i32
    return %arg0, %c0_i32 : i32, i32
  }
  func.func @transform_1(%arg0: i32, %arg1: i32) -> (i32, i32) {
    %c0_i32 = arith.constant 0 : i32
    %c0_i32_0 = arith.constant 0 : i32
    return %c0_i32, %arg1 : i32, i32
  }
  func.func @transform_2(%arg0: i32, %arg1: i32) -> (i32, i32) {
    %c0_i32 = arith.constant 0 : i32
    %c0_i32_0 = arith.constant 0 : i32
    return %arg1, %c0_i32 : i32, i32
  }
  func.func @transform_3(%arg0: i32, %arg1: i32) -> (i32, i32) {
    %c0_i32 = arith.constant 0 : i32
    %c0_i32_0 = arith.constant 0 : i32
    return %arg0, %c0_i32 : i32, i32
  }
}

</mosaic_0001>

<llo_original>
// kernel: mlp_forward.1
$region0: #{mlp_forward.1}
  #allocation0 [shape = 'u32[]', space=smem, size = 0x4, offset = 0x4, fixed_abs, tag = 'smem constant byte address 0x4 - core index']
  #allocation1 [shape = 'u32[72,128]{1,0:T(1,128)}', space=vmem, size = 0x9000, scoped, tag = 'internal scratch']
  #allocation2 [shape = 'f32[16,256]{1,0:T(8,128)}', space=vmem, size = 0x4000, scoped, tag = 'scratch operand']
  %s0 = inlined_call_operand.vmem [shape: bf16[16,256], index: 0, kind: input, shape index: {}]
  %s1 = inlined_call_operand.hbm [shape: bf16[256,1024], index: 1, kind: input, shape index: {}]
  %s2 = inlined_call_operand.hbm [shape: bf16[1024,256], index: 2, kind: input, shape index: {}]
  %s3 = inlined_call_operand.hbm [shape: f32[16,256], index: 3, kind: output, shape index: {}]
  %s4 = sld [smem:[#allocation0]]
  $region42: #{mlp_forward.1} parent=0
    _
  %s6 = ssub.s32 1, %s4
  %s7 = scalar_select 0, %s6, %s4
  $region1: #{mlp_forward.1} parent=0
    #allocation3 [shape = 'u8[524288]{0}', space=vmem, size = 0x80000, scoped, tag = 'input window, operand 1, single buffered']
    #allocation4 [shape = 's32[1]{0}', space=sflag, size = 0x4, scoped, tag = 'scoped memory for mlp_forward.1']
    #allocation5 [shape = 's32[1]{0}', space=sflag, size = 0x4, scoped, tag = 'scoped memory for mlp_forward.1']
    #allocation6 [shape = 'u8[524288]{0}', space=vmem, size = 0x80000, scoped, tag = 'input window, operand 2, single buffered']
    #allocation7 [shape = 's32[1]{0}', space=sflag, size = 0x4, scoped, tag = 'scoped memory for mlp_forward.1']
    #allocation8 [shape = 'u8[16384]{0}', space=vmem, size = 0x4000, scoped, tag = 'output window, operand 0, single buffered']
    %8 = vsyncpa [#allocation4], 0
    %9 = vsyncpa [#allocation7], 0
    %10 = vsyncpa [#allocation5], 0
    // Predicated region
    $region2: #{mlp_forward.1} parent=1 // pred_check
      _
    $region3: #{mlp_forward.1} parent=1 // pred_check_branch
      %12 = sbr.rel (0) target = $region5
    $region4: #{mlp_forward.1} parent=1 // pred_region
      _
    $region5: #{mlp_forward.1} parent=1 // pred_fallthru
      _
    // Predicated region
    $region6: #{mlp_forward.1} parent=1 // pred_check
      _
    $region7: #{mlp_forward.1} parent=1 // pred_check_branch
      %14 = sbr.rel (0) target = $region9
    $region8: #{mlp_forward.1} parent=1 // pred_region
      %16 = vsyncadd [#allocation4], 0
      %s17 = sshll.u32 %s1, 4
      %s18 = int_to_ptr.hbm [resolvable:$true] %s17
      %s19 = sshll.u32 [#allocation3], 4
      %s20 = int_to_ptr.vmem [resolvable:$true] %s19
      %25 = dma.hbm_to_vmem [thread:$0]  %s18, 16384, %s20, [#allocation4], 512, 512, 32
    $region9: #{mlp_forward.1} parent=1 // pred_fallthru
      _
    // Predicated region
    $region10: #{mlp_forward.1} parent=1 // pred_check
      _
    $region11: #{mlp_forward.1} parent=1 // pred_check_branch
      %27 = sbr.rel (0) target = $region13
    $region12: #{mlp_forward.1} parent=1 // pred_region
      %29 = vsyncadd [#allocation7], 0
      %s30 = sshll.u32 %s2, 4
      %s31 = int_to_ptr.hbm [resolvable:$true] %s30
      %s32 = sshll.u32 [#allocation6], 4
      %s33 = int_to_ptr.vmem [resolvable:$true] %s32
      %38 = dma.hbm_to_vmem [thread:$0]  %s31, 16384, %s33, [#allocation7], 128, 128, 8
    $region13: #{mlp_forward.1} parent=1 // pred_fallthru
      _
    // Predicated region
    $region14: #{mlp_forward.1} parent=1 // pred_check
      _
    $region15: #{mlp_forward.1} parent=1 // pred_check_branch
      %40 = sbr.rel (0) target = $region17
    $region16: #{mlp_forward.1} parent=1 // pred_region
      %42 = dma.done [#allocation4], 16384
    $region17: #{mlp_forward.1} parent=1 // pred_fallthru
      _
    // Predicated region
    $region18: #{mlp_forward.1} parent=1 // pred_check
      _
    $region19: #{mlp_forward.1} parent=1 // pred_check_branch
      %44 = sbr.rel (0) target = $region21
    $region20: #{mlp_forward.1} parent=1 // pred_region
      %46 = dma.done [#allocation7], 16384
    $region21: #{mlp_forward.1} parent=1 // pred_fallthru
      _
    %v47 = vld [vmem:[%s0] sm:$0xff]
    %v48 = vld [vmem:[%s0 + $0x8] sm:$0xff]
    %v49 = vld [vmem:[#allocation3] sm:$0xff]
    %v50 = vld [vmem:[#allocation3 + $0x8] sm:$0xff]
    %v51 = vld [vmem:[#allocation3 + $0x10] sm:$0xff]
    %v52 = vld [vmem:[#allocation3 + $0x18] sm:$0xff]
    %v53 = vld [vmem:[#allocation3 + $0x20] sm:$0xff]
    %v54 = vld [vmem:[#allocation3 + $0x28] sm:$0xff]
    %v55 = vld [vmem:[#allocation3 + $0x30] sm:$0xff]
    %v56 = vld [vmem:[#allocation3 + $0x38] sm:$0xff]
    %v57 = vld [vmem:[#allocation3 + $0x40] sm:$0xff]
    %v58 = vld [vmem:[#allocation3 + $0x48] sm:$0xff]
    %v59 = vld [vmem:[#allocation3 + $0x50] sm:$0xff]
    %v60 = vld [vmem:[#allocation3 + $0x58] sm:$0xff]
    %v61 = vld [vmem:[#allocation3 + $0x60] sm:$0xff]
    %v62 = vld [vmem:[#allocation3 + $0x68] sm:$0xff]
    %v63 = vld [vmem:[#allocation3 + $0x70] sm:$0xff]
    %v64 = vld [vmem:[#allocation3 + $0x78] sm:$0xff]
    %v65 = vld [vmem:[#allocation3 + $0x80] sm:$0xff]
    %v66 = vld [vmem:[#allocation3 + $0x88] sm:$0xff]
    %v67 = vld [vmem:[#allocation3 + $0x90] sm:$0xff]
    %v68 = vld [vmem:[#allocation3 + $0x98] sm:$0xff]
    %v69 = vld [vmem:[#allocation3 + $0xa0] sm:$0xff]
    %v70 = vld [vmem:[#allocation3 + $0xa8] sm:$0xff]
    %v71 = vld [vmem:[#allocation3 + $0xb0] sm:$0xff]
    %v72 = vld [vmem:[#allocation3 + $0xb8] sm:$0xff]
    %v73 = vld [vmem:[#allocation3 + $0xc0] sm:$0xff]
    %v74 = vld [vmem:[#allocation3 + $0xc8] sm:$0xff]
    %v75 = vld [vmem:[#allocation3 + $0xd0] sm:$0xff]
    %v76 = vld [vmem:[#allocation3 + $0xd8] sm:$0xff]
    %v77 = vld [vmem:[#allocation3 + $0xe0] sm:$0xff]
    %v78 = vld [vmem:[#allocation3 + $0xe8] sm:$0xff]
    %v79 = vld [vmem:[#allocation3 + $0xf0] sm:$0xff]
    %v80 = vld [vmem:[#allocation3 + $0xf8] sm:$0xff]
    %v81 = vld [vmem:[#allocation3 + $0x100] sm:$0xff]
    %v82 = vld [vmem:[#allocation3 + $0x108] sm:$0xff]
    %v83 = vld [vmem:[#allocation3 + $0x110] sm:$0xff]
    %v84 = vld [vmem:[#allocation3 + $0x118] sm:$0xff]
    %v85 = vld [vmem:[#allocation3 + $0x120] sm:$0xff]
    %v86 = vld [vmem:[#allocation3 + $0x128] sm:$0xff]
    %v87 = vld [vmem:[#allocation3 + $0x130] sm:$0xff]
    %v88 = vld [vmem:[#allocation3 + $0x138] sm:$0xff]
    %v89 = vld [vmem:[#allocation3 + $0x140] sm:$0xff]
    %v90 = vld [vmem:[#allocation3 + $0x148] sm:$0xff]
    %v91 = vld [vmem:[#allocation3 + $0x150] sm:$0xff]
    %v92 = vld [vmem:[#allocation3 + $0x158] sm:$0xff]
    %v93 = vld [vmem:[#allocation3 + $0x160] sm:$0xff]
    %v94 = vld [vmem:[#allocation3 + $0x168] sm:$0xff]
    %v95 = vld [vmem:[#allocation3 + $0x170] sm:$0xff]
    %v96 = vld [vmem:[#allocation3 + $0x178] sm:$0xff]
    %v97 = vld [vmem:[#allocation3 + $0x180] sm:$0xff]
    %v98 = vld [vmem:[#allocation3 + $0x188] sm:$0xff]
    %v99 = vld [vmem:[#allocation3 + $0x190] sm:$0xff]
    %v100 = vld [vmem:[#allocation3 + $0x198] sm:$0xff]
    %v101 = vld [vmem:[#allocation3 + $0x1a0] sm:$0xff]
    %v102 = vld [vmem:[#allocation3 + $0x1a8] sm:$0xff]
    %v103 = vld [vmem:[#allocation3 + $0x1b0] sm:$0xff]
    %v104 = vld [vmem:[#allocation3 + $0x1b8] sm:$0xff]
    %v105 = vld [vmem:[#allocation3 + $0x1c0] sm:$0xff]
    %v106 = vld [vmem:[#allocation3 + $0x1c8] sm:$0xff]
    %v107 = vld [vmem:[#allocation3 + $0x1d0] sm:$0xff]
    %v108 = vld [vmem:[#allocation3 + $0x1d8] sm:$0xff]
    %v109 = vld [vmem:[#allocation3 + $0x1e0] sm:$0xff]
    %v110 = vld [vmem:[#allocation3 + $0x1e8] sm:$0xff]
    %v111 = vld [vmem:[#allocation3 + $0x1f0] sm:$0xff]
    %v112 = vld [vmem:[#allocation3 + $0x1f8] sm:$0xff]
    %v113 = vld [vmem:[#allocation3 + $0x200] sm:$0xff]
    %v114 = vld [vmem:[#allocation3 + $0x208] sm:$0xff]
    %v115 = vld [vmem:[#allocation3 + $0x210] sm:$0xff]
    %v116 = vld [vmem:[#allocation3 + $0x218] sm:$0xff]
    %v117 = vld [vmem:[#allocation3 + $0x220] sm:$0xff]
    %v118 = vld [vmem:[#allocation3 + $0x228] sm:$0xff]
    %v119 = vld [vmem:[#allocation3 + $0x230] sm:$0xff]
    %v120 = vld [vmem:[#allocation3 + $0x238] sm:$0xff]
    %v121 = vld [vmem:[#allocation3 + $0x240] sm:$0xff]
    %v122 = vld [vmem:[#allocation3 + $0x248] sm:$0xff]
    %v123 = vld [vmem:[#allocation3 + $0x250] sm:$0xff]
    %v124 = vld [vmem:[#allocation3 + $0x258] sm:$0xff]
    %v125 = vld [vmem:[#allocation3 + $0x260] sm:$0xff]
    %v126 = vld [vmem:[#allocation3 + $0x268] sm:$0xff]
    %v127 = vld [vmem:[#allocation3 + $0x270] sm:$0xff]
    %v128 = vld [vmem:[#allocation3 + $0x278] sm:$0xff]
    %v129 = vld [vmem:[#allocation3 + $0x280] sm:$0xff]
    %v130 = vld [vmem:[#allocation3 + $0x288] sm:$0xff]
    %v131 = vld [vmem:[#allocation3 + $0x290] sm:$0xff]
    %v132 = vld [vmem:[#allocation3 + $0x298] sm:$0xff]
    %v133 = vld [vmem:[#allocation3 + $0x2a0] sm:$0xff]
    %v134 = vld [vmem:[#allocation3 + $0x2a8] sm:$0xff]
    %v135 = vld [vmem:[#allocation3 + $0x2b0] sm:$0xff]
    %v136 = vld [vmem:[#allocation3 + $0x2b8] sm:$0xff]
    %v137 = vld [vmem:[#allocation3 + $0x2c0] sm:$0xff]
    %v138 = vld [vmem:[#allocation3 + $0x2c8] sm:$0xff]
    %v139 = vld [vmem:[#allocation3 + $0x2d0] sm:$0xff]
    %v140 = vld [vmem:[#allocation3 + $0x2d8] sm:$0xff]
    %v141 = vld [vmem:[#allocation3 + $0x2e0] sm:$0xff]
    %v142 = vld [vmem:[#allocation3 + $0x2e8] sm:$0xff]
    %v143 = vld [vmem:[#allocation3 + $0x2f0] sm:$0xff]
    %v144 = vld [vmem:[#allocation3 + $0x2f8] sm:$0xff]
    %v145 = vld [vmem:[#allocation3 + $0x300] sm:$0xff]
    %v146 = vld [vmem:[#allocation3 + $0x308] sm:$0xff]
    %v147 = vld [vmem:[#allocation3 + $0x310] sm:$0xff]
    %v148 = vld [vmem:[#allocation3 + $0x318] sm:$0xff]
    %v149 = vld [vmem:[#allocation3 + $0x320] sm:$0xff]
    %v150 = vld [vmem:[#allocation3 + $0x328] sm:$0xff]
    %v151 = vld [vmem:[#allocation3 + $0x330] sm:$0xff]
    %v152 = vld [vmem:[#allocation3 + $0x338] sm:$0xff]
    %v153 = vld [vmem:[#allocation3 + $0x340] sm:$0xff]
    %v154 = vld [vmem:[#allocation3 + $0x348] sm:$0xff]
    %v155 = vld [vmem:[#allocation3 + $0x350] sm:$0xff]
    %v156 = vld [vmem:[#allocation3 + $0x358] sm:$0xff]
    %v157 = vld [vmem:[#allocation3 + $0x360] sm:$0xff]
    %v158 = vld [vmem:[#allocation3 + $0x368] sm:$0xff]
    %v159 = vld [vmem:[#allocation3 + $0x370] sm:$0xff]
    %v160 = vld [vmem:[#allocation3 + $0x378] sm:$0xff]
    %v161 = vld [vmem:[#allocation3 + $0x380] sm:$0xff]
    %v162 = vld [vmem:[#allocation3 + $0x388] sm:$0xff]
    %v163 = vld [vmem:[#allocation3 + $0x390] sm:$0xff]
    %v164 = vld [vmem:[#allocation3 + $0x398] sm:$0xff]
    %v165 = vld [vmem:[#allocation3 + $0x3a0] sm:$0xff]
    %v166 = vld [vmem:[#allocation3 + $0x3a8] sm:$0xff]
    %v167 = vld [vmem:[#allocation3 + $0x3b0] sm:$0xff]
    %v168 = vld [vmem:[#allocation3 + $0x3b8] sm:$0xff]
    %v169 = vld [vmem:[#allocation3 + $0x3c0] sm:$0xff]
    %v170 = vld [vmem:[#allocation3 + $0x3c8] sm:$0xff]
    %v171 = vld [vmem:[#allocation3 + $0x3d0] sm:$0xff]
    %v172 = vld [vmem:[#allocation3 + $0x3d8] sm:$0xff]
    %v173 = vld [vmem:[#allocation3 + $0x3e0] sm:$0xff]
    %v174 = vld [vmem:[#allocation3 + $0x3e8] sm:$0xff]
    %v175 = vld [vmem:[#allocation3 + $0x3f0] sm:$0xff]
    %v176 = vld [vmem:[#allocation3 + $0x3f8] sm:$0xff]
    %v179 = vunpack.c.l.b16 %v47
    %v180 = vunpack.c.h.b16 %v47
    %v181 = vunpack.c.l.b16 %v48
    %v182 = vunpack.c.h.b16 %v48
    %v183 = vpack.c.b16 %v181, %v179
    %v184 = vpack.c.b16 %v182, %v180
    %v315 = vunpack.c.l.b16 %v49
    %v316 = vunpack.c.h.b16 %v49
    %v317 = vunpack.c.l.b16 %v50
    %v318 = vunpack.c.h.b16 %v50
    %v319 = vunpack.c.l.b16 %v51
    %v320 = vunpack.c.h.b16 %v51
    %v321 = vunpack.c.l.b16 %v52
    %v322 = vunpack.c.h.b16 %v52
    %v323 = vunpack.c.l.b16 %v53
    %v324 = vunpack.c.h.b16 %v53
    %v325 = vunpack.c.l.b16 %v54
    %v326 = vunpack.c.h.b16 %v54
    %v327 = vunpack.c.l.b16 %v55
    %v328 = vunpack.c.h.b16 %v55
    %v329 = vunpack.c.l.b16 %v56
    %v330 = vunpack.c.h.b16 %v56
    %v331 = vunpack.c.l.b16 %v57
    %v332 = vunpack.c.h.b16 %v57
    %v333 = vunpack.c.l.b16 %v58
    %v334 = vunpack.c.h.b16 %v58
    %v335 = vunpack.c.l.b16 %v59
    %v336 = vunpack.c.h.b16 %v59
    %v337 = vunpack.c.l.b16 %v60
    %v338 = vunpack.c.h.b16 %v60
    %v339 = vunpack.c.l.b16 %v61
    %v340 = vunpack.c.h.b16 %v61
    %v341 = vunpack.c.l.b16 %v62
    %v342 = vunpack.c.h.b16 %v62
    %v343 = vunpack.c.l.b16 %v63
    %v344 = vunpack.c.h.b16 %v63
    %v345 = vunpack.c.l.b16 %v64
    %v346 = vunpack.c.h.b16 %v64
    %v347 = vunpack.c.l.b16 %v65
    %v348 = vunpack.c.h.b16 %v65
    %v349 = vunpack.c.l.b16 %v66
    %v350 = vunpack.c.h.b16 %v66
    %v351 = vunpack.c.l.b16 %v67
    %v352 = vunpack.c.h.b16 %v67
    %v353 = vunpack.c.l.b16 %v68
    %v354 = vunpack.c.h.b16 %v68
    %v355 = vunpack.c.l.b16 %v69
    %v356 = vunpack.c.h.b16 %v69
    %v357 = vunpack.c.l.b16 %v70
    %v358 = vunpack.c.h.b16 %v70
    %v359 = vunpack.c.l.b16 %v71
    %v360 = vunpack.c.h.b16 %v71
    %v361 = vunpack.c.l.b16 %v72
    %v362 = vunpack.c.h.b16 %v72
    %v363 = vunpack.c.l.b16 %v73
    %v364 = vunpack.c.h.b16 %v73
    %v365 = vunpack.c.l.b16 %v74
    %v366 = vunpack.c.h.b16 %v74
    %v367 = vunpack.c.l.b16 %v75
    %v368 = vunpack.c.h.b16 %v75
    %v369 = vunpack.c.l.b16 %v76
    %v370 = vunpack.c.h.b16 %v76
    %v371 = vunpack.c.l.b16 %v77
    %v372 = vunpack.c.h.b16 %v77
    %v373 = vunpack.c.l.b16 %v78
    %v374 = vunpack.c.h.b16 %v78
    %v375 = vunpack.c.l.b16 %v79
    %v376 = vunpack.c.h.b16 %v79
    %v377 = vunpack.c.l.b16 %v80
    %v378 = vunpack.c.h.b16 %v80
    %v379 = vunpack.c.l.b16 %v81
    %v380 = vunpack.c.h.b16 %v81
    %v381 = vunpack.c.l.b16 %v82
    %v382 = vunpack.c.h.b16 %v82
    %v383 = vunpack.c.l.b16 %v83
    %v384 = vunpack.c.h.b16 %v83
    %v385 = vunpack.c.l.b16 %v84
    %v386 = vunpack.c.h.b16 %v84
    %v387 = vunpack.c.l.b16 %v85
    %v388 = vunpack.c.h.b16 %v85
    %v389 = vunpack.c.l.b16 %v86
    %v390 = vunpack.c.h.b16 %v86
    %v391 = vunpack.c.l.b16 %v87
    %v392 = vunpack.c.h.b16 %v87
    %v393 = vunpack.c.l.b16 %v88
    %v394 = vunpack.c.h.b16 %v88
    %v395 = vunpack.c.l.b16 %v89
    %v396 = vunpack.c.h.b16 %v89
    %v397 = vunpack.c.l.b16 %v90
    %v398 = vunpack.c.h.b16 %v90
    %v399 = vunpack.c.l.b16 %v91
    %v400 = vunpack.c.h.b16 %v91
    %v401 = vunpack.c.l.b16 %v92
    %v402 = vunpack.c.h.b16 %v92
    %v403 = vunpack.c.l.b16 %v93
    %v404 = vunpack.c.h.b16 %v93
    %v405 = vunpack.c.l.b16 %v94
    %v406 = vunpack.c.h.b16 %v94
    %v407 = vunpack.c.l.b16 %v95
    %v408 = vunpack.c.h.b16 %v95
    %v409 = vunpack.c.l.b16 %v96
    %v410 = vunpack.c.h.b16 %v96
    %v411 = vunpack.c.l.b16 %v97
    %v412 = vunpack.c.h.b16 %v97
    %v413 = vunpack.c.l.b16 %v98
    %v414 = vunpack.c.h.b16 %v98
    %v415 = vunpack.c.l.b16 %v99
    %v416 = vunpack.c.h.b16 %v99
    %v417 = vunpack.c.l.b16 %v100
    %v418 = vunpack.c.h.b16 %v100
    %v419 = vunpack.c.l.b16 %v101
    %v420 = vunpack.c.h.b16 %v101
    %v421 = vunpack.c.l.b16 %v102
    %v422 = vunpack.c.h.b16 %v102
    %v423 = vunpack.c.l.b16 %v103
    %v424 = vunpack.c.h.b16 %v103
    %v425 = vunpack.c.l.b16 %v104
    %v426 = vunpack.c.h.b16 %v104
    %v427 = vunpack.c.l.b16 %v105
    %v428 = vunpack.c.h.b16 %v105
    %v429 = vunpack.c.l.b16 %v106
    %v430 = vunpack.c.h.b16 %v106
    %v431 = vunpack.c.l.b16 %v107
    %v432 = vunpack.c.h.b16 %v107
    %v433 = vunpack.c.l.b16 %v108
    %v434 = vunpack.c.h.b16 %v108
    %v435 = vunpack.c.l.b16 %v109
    %v436 = vunpack.c.h.b16 %v109
    %v437 = vunpack.c.l.b16 %v110
    %v438 = vunpack.c.h.b16 %v110
    %v439 = vunpack.c.l.b16 %v111
    %v440 = vunpack.c.h.b16 %v111
    %v441 = vunpack.c.l.b16 %v112
    %v442 = vunpack.c.h.b16 %v112
    %v443 = vunpack.c.l.b16 %v113
    %v444 = vunpack.c.h.b16 %v113
    %v445 = vunpack.c.l.b16 %v114
    %v446 = vunpack.c.h.b16 %v114
    %v447 = vunpack.c.l.b16 %v115
    %v448 = vunpack.c.h.b16 %v115
    %v449 = vunpack.c.l.b16 %v116
    %v450 = vunpack.c.h.b16 %v116
    %v451 = vunpack.c.l.b16 %v117
    %v452 = vunpack.c.h.b16 %v117
    %v453 = vunpack.c.l.b16 %v118
    %v454 = vunpack.c.h.b16 %v118
    %v455 = vunpack.c.l.b16 %v119
    %v456 = vunpack.c.h.b16 %v119
    %v457 = vunpack.c.l.b16 %v120
    %v458 = vunpack.c.h.b16 %v120
    %v459 = vunpack.c.l.b16 %v121
    %v460 = vunpack.c.h.b16 %v121
    %v461 = vunpack.c.l.b16 %v122
    %v462 = vunpack.c.h.b16 %v122
    %v463 = vunpack.c.l.b16 %v123
    %v464 = vunpack.c.h.b16 %v123
    %v465 = vunpack.c.l.b16 %v124
    %v466 = vunpack.c.h.b16 %v124
    %v467 = vunpack.c.l.b16 %v125
    %v468 = vunpack.c.h.b16 %v125
    %v469 = vunpack.c.l.b16 %v126
    %v470 = vunpack.c.h.b16 %v126
    %v471 = vunpack.c.l.b16 %v127
    %v472 = vunpack.c.h.b16 %v127
    %v473 = vunpack.c.l.b16 %v128
    %v474 = vunpack.c.h.b16 %v128
    %v475 = vunpack.c.l.b16 %v129
    %v476 = vunpack.c.h.b16 %v129
    %v477 = vunpack.c.l.b16 %v130
    %v478 = vunpack.c.h.b16 %v130
    %v479 = vunpack.c.l.b16 %v131
    %v480 = vunpack.c.h.b16 %v131
    %v481 = vunpack.c.l.b16 %v132
    %v482 = vunpack.c.h.b16 %v132
    %v483 = vunpack.c.l.b16 %v133
    %v484 = vunpack.c.h.b16 %v133
    %v485 = vunpack.c.l.b16 %v134
    %v486 = vunpack.c.h.b16 %v134
    %v487 = vunpack.c.l.b16 %v135
    %v488 = vunpack.c.h.b16 %v135
    %v489 = vunpack.c.l.b16 %v136
    %v490 = vunpack.c.h.b16 %v136
    %v491 = vunpack.c.l.b16 %v137
    %v492 = vunpack.c.h.b16 %v137
    %v493 = vunpack.c.l.b16 %v138
    %v494 = vunpack.c.h.b16 %v138
    %v495 = vunpack.c.l.b16 %v139
    %v496 = vunpack.c.h.b16 %v139
    %v497 = vunpack.c.l.b16 %v140
    %v498 = vunpack.c.h.b16 %v140
    %v499 = vunpack.c.l.b16 %v141
    %v500 = vunpack.c.h.b16 %v141
    %v501 = vunpack.c.l.b16 %v142
    %v502 = vunpack.c.h.b16 %v142
    %v503 = vunpack.c.l.b16 %v143
    %v504 = vunpack.c.h.b16 %v143
    %v505 = vunpack.c.l.b16 %v144
    %v506 = vunpack.c.h.b16 %v144
    %v507 = vunpack.c.l.b16 %v145
    %v508 = vunpack.c.h.b16 %v145
    %v509 = vunpack.c.l.b16 %v146
    %v510 = vunpack.c.h.b16 %v146
    %v511 = vunpack.c.l.b16 %v147
    %v512 = vunpack.c.h.b16 %v147
    %v513 = vunpack.c.l.b16 %v148
    %v514 = vunpack.c.h.b16 %v148
    %v515 = vunpack.c.l.b16 %v149
    %v516 = vunpack.c.h.b16 %v149
    %v517 = vunpack.c.l.b16 %v150
    %v518 = vunpack.c.h.b16 %v150
    %v519 = vunpack.c.l.b16 %v151
    %v520 = vunpack.c.h.b16 %v151
    %v521 = vunpack.c.l.b16 %v152
    %v522 = vunpack.c.h.b16 %v152
    %v523 = vunpack.c.l.b16 %v153
    %v524 = vunpack.c.h.b16 %v153
    %v525 = vunpack.c.l.b16 %v154
    %v526 = vunpack.c.h.b16 %v154
    %v527 = vunpack.c.l.b16 %v155
    %v528 = vunpack.c.h.b16 %v155
    %v529 = vunpack.c.l.b16 %v156
    %v530 = vunpack.c.h.b16 %v156
    %v531 = vunpack.c.l.b16 %v157
    %v532 = vunpack.c.h.b16 %v157
    %v533 = vunpack.c.l.b16 %v158
    %v534 = vunpack.c.h.b16 %v158
    %v535 = vunpack.c.l.b16 %v159
    %v536 = vunpack.c.h.b16 %v159
    %v537 = vunpack.c.l.b16 %v160
    %v538 = vunpack.c.h.b16 %v160
    %v539 = vunpack.c.l.b16 %v161
    %v540 = vunpack.c.h.b16 %v161
    %v541 = vunpack.c.l.b16 %v162
    %v542 = vunpack.c.h.b16 %v162
    %v543 = vunpack.c.l.b16 %v163
    %v544 = vunpack.c.h.b16 %v163
    %v545 = vunpack.c.l.b16 %v164
    %v546 = vunpack.c.h.b16 %v164
    %v547 = vunpack.c.l.b16 %v165
    %v548 = vunpack.c.h.b16 %v165
    %v549 = vunpack.c.l.b16 %v166
    %v550 = vunpack.c.h.b16 %v166
    %v551 = vunpack.c.l.b16 %v167
    %v552 = vunpack.c.h.b16 %v167
    %v553 = vunpack.c.l.b16 %v168
    %v554 = vunpack.c.h.b16 %v168
    %v555 = vunpack.c.l.b16 %v169
    %v556 = vunpack.c.h.b16 %v169
    %v557 = vunpack.c.l.b16 %v170
    %v558 = vunpack.c.h.b16 %v170
    %v559 = vunpack.c.l.b16 %v171
    %v560 = vunpack.c.h.b16 %v171
    %v561 = vunpack.c.l.b16 %v172
    %v562 = vunpack.c.h.b16 %v172
    %v563 = vunpack.c.l.b16 %v173
    %v564 = vunpack.c.h.b16 %v173
    %v565 = vunpack.c.l.b16 %v174
    %v566 = vunpack.c.h.b16 %v174
    %v567 = vunpack.c.l.b16 %v175
    %v568 = vunpack.c.h.b16 %v175
    %v569 = vunpack.c.l.b16 %v176
    %v570 = vunpack.c.h.b16 %v176
    %v571 = vpack.c.b16 %v323, %v315
    %v572 = vpack.c.b16 %v324, %v316
    %v573 = vpack.c.b16 %v325, %v317
    %v574 = vpack.c.b16 %v326, %v318
    %v575 = vpack.c.b16 %v327, %v319
    %v576 = vpack.c.b16 %v328, %v320
    %v577 = vpack.c.b16 %v329, %v321
    %v578 = vpack.c.b16 %v330, %v322
    %v579 = vpack.c.b16 %v339, %v331
    %v580 = vpack.c.b16 %v340, %v332
    %v581 = vpack.c.b16 %v341, %v333
    %v582 = vpack.c.b16 %v342, %v334
    %v583 = vpack.c.b16 %v343, %v335
    %v584 = vpack.c.b16 %v344, %v336
    %v585 = vpack.c.b16 %v345, %v337
    %v586 = vpack.c.b16 %v346, %v338
    %v587 = vpack.c.b16 %v355, %v347
    %v588 = vpack.c.b16 %v356, %v348
    %v589 = vpack.c.b16 %v357, %v349
    %v590 = vpack.c.b16 %v358, %v350
    %v591 = vpack.c.b16 %v359, %v351
    %v592 = vpack.c.b16 %v360, %v352
    %v593 = vpack.c.b16 %v361, %v353
    %v594 = vpack.c.b16 %v362, %v354
    %v595 = vpack.c.b16 %v371, %v363
    %v596 = vpack.c.b16 %v372, %v364
    %v597 = vpack.c.b16 %v373, %v365
    %v598 = vpack.c.b16 %v374, %v366
    %v599 = vpack.c.b16 %v375, %v367
    %v600 = vpack.c.b16 %v376, %v368
    %v601 = vpack.c.b16 %v377, %v369
    %v602 = vpack.c.b16 %v378, %v370
    %v603 = vpack.c.b16 %v387, %v379
    %v604 = vpack.c.b16 %v388, %v380
    %v605 = vpack.c.b16 %v389, %v381
    %v606 = vpack.c.b16 %v390, %v382
    %v607 = vpack.c.b16 %v391, %v383
    %v608 = vpack.c.b16 %v392, %v384
    %v609 = vpack.c.b16 %v393, %v385
    %v610 = vpack.c.b16 %v394, %v386
    %v611 = vpack.c.b16 %v403, %v395
    %v612 = vpack.c.b16 %v404, %v396
    %v613 = vpack.c.b16 %v405, %v397
    %v614 = vpack.c.b16 %v406, %v398
    %v615 = vpack.c.b16 %v407, %v399
    %v616 = vpack.c.b16 %v408, %v400
    %v617 = vpack.c.b16 %v409, %v401
    %v618 = vpack.c.b16 %v410, %v402
    %v619 = vpack.c.b16 %v419, %v411
    %v620 = vpack.c.b16 %v420, %v412
    %v621 = vpack.c.b16 %v421, %v413
    %v622 = vpack.c.b16 %v422, %v414
    %v623 = vpack.c.b16 %v423, %v415
    %v624 = vpack.c.b16 %v424, %v416
    %v625 = vpack.c.b16 %v425, %v417
    %v626 = vpack.c.b16 %v426, %v418
    %v627 = vpack.c.b16 %v435, %v427
    %v628 = vpack.c.b16 %v436, %v428
    %v629 = vpack.c.b16 %v437, %v429
    %v630 = vpack.c.b16 %v438, %v430
    %v631 = vpack.c.b16 %v439, %v431
    %v632 = vpack.c.b16 %v440, %v432
    %v633 = vpack.c.b16 %v441, %v433
    %v634 = vpack.c.b16 %v442, %v434
    %v635 = vpack.c.b16 %v451, %v443
    %v636 = vpack.c.b16 %v452, %v444
    %v637 = vpack.c.b16 %v453, %v445
    %v638 = vpack.c.b16 %v454, %v446
    %v639 = vpack.c.b16 %v455, %v447
    %v640 = vpack.c.b16 %v456, %v448
    %v641 = vpack.c.b16 %v457, %v449
    %v642 = vpack.c.b16 %v458, %v450
    %v643 = vpack.c.b16 %v467, %v459
    %v644 = vpack.c.b16 %v468, %v460
    %v645 = vpack.c.b16 %v469, %v461
    %v646 = vpack.c.b16 %v470, %v462
    %v647 = vpack.c.b16 %v471, %v463
    %v648 = vpack.c.b16 %v472, %v464
    %v649 = vpack.c.b16 %v473, %v465
    %v650 = vpack.c.b16 %v474, %v466
    %v651 = vpack.c.b16 %v483, %v475
    %v652 = vpack.c.b16 %v484, %v476
    %v653 = vpack.c.b16 %v485, %v477
    %v654 = vpack.c.b16 %v486, %v478
    %v655 = vpack.c.b16 %v487, %v479
    %v656 = vpack.c.b16 %v488, %v480
    %v657 = vpack.c.b16 %v489, %v481
    %v658 = vpack.c.b16 %v490, %v482
    %v659 = vpack.c.b16 %v499, %v491
    %v660 = vpack.c.b16 %v500, %v492
    %v661 = vpack.c.b16 %v501, %v493
    %v662 = vpack.c.b16 %v502, %v494
    %v663 = vpack.c.b16 %v503, %v495
    %v664 = vpack.c.b16 %v504, %v496
    %v665 = vpack.c.b16 %v505, %v497
    %v666 = vpack.c.b16 %v506, %v498
    %v667 = vpack.c.b16 %v515, %v507
    %v668 = vpack.c.b16 %v516, %v508
    %v669 = vpack.c.b16 %v517, %v509
    %v670 = vpack.c.b16 %v518, %v510
    %v671 = vpack.c.b16 %v519, %v511
    %v672 = vpack.c.b16 %v520, %v512
    %v673 = vpack.c.b16 %v521, %v513
    %v674 = vpack.c.b16 %v522, %v514
    %v675 = vpack.c.b16 %v531, %v523
    %v676 = vpack.c.b16 %v532, %v524
    %v677 = vpack.c.b16 %v533, %v525
    %v678 = vpack.c.b16 %v534, %v526
    %v679 = vpack.c.b16 %v535, %v527
    %v680 = vpack.c.b16 %v536, %v528
    %v681 = vpack.c.b16 %v537, %v529
    %v682 = vpack.c.b16 %v538, %v530
    %v683 = vpack.c.b16 %v547, %v539
    %v684 = vpack.c.b16 %v548, %v540
    %v685 = vpack.c.b16 %v549, %v541
    %v686 = vpack.c.b16 %v550, %v542
    %v687 = vpack.c.b16 %v551, %v543
    %v688 = vpack.c.b16 %v552, %v544
    %v689 = vpack.c.b16 %v553, %v545
    %v690 = vpack.c.b16 %v554, %v546
    %v691 = vpack.c.b16 %v563, %v555
    %v692 = vpack.c.b16 %v564, %v556
    %v693 = vpack.c.b16 %v565, %v557
    %v694 = vpack.c.b16 %v566, %v558
    %v695 = vpack.c.b16 %v567, %v559
    %v696 = vpack.c.b16 %v568, %v560
    %v697 = vpack.c.b16 %v569, %v561
    %v698 = vpack.c.b16 %v570, %v562
    %827 = vmatpush.bf16.msra.mxu0 %v627
    %828 = vmatpush.bf16.msra.mxu0 %v619
    %829 = vmatpush.bf16.msra.mxu0 %v611
    %830 = vmatpush.bf16.msra.mxu0 %v603
    %831 = vmatpush.bf16.msra.mxu0 %v595
    %832 = vmatpush.bf16.msra.mxu0 %v587
    %833 = vmatpush.bf16.msra.mxu0 %v579
    %834 = vmatpush.bf16.msra.mxu0 %v571
    %835 = vmatmul.bf16.gmra.mxu0 %v183
    %v836 = vpop.f32.mrf.mxu0
    %v837 = vadd.f32 0.0, %v836
    %v838 = vpop.f32.mrf.mxu0
    %v839 = vadd.f32 0.0, %v838
    %840 = vdwg.mxu0
    %841 = vmatpush.bf16.msra.mxu0 %v691
    %842 = vmatpush.bf16.msra.mxu0 %v683
    %843 = vmatpush.bf16.msra.mxu0 %v675
    %844 = vmatpush.bf16.msra.mxu0 %v667
    %845 = vmatpush.bf16.msra.mxu0 %v659
    %846 = vmatpush.bf16.msra.mxu0 %v651
    %847 = vmatpush.bf16.msra.mxu0 %v643
    %848 = vmatpush.bf16.msra.mxu0 %v635
    %849 = vmatmul.bf16.gmra.mxu0 %v184
    %v850 = vpop.f32.mrf.mxu0
    %v851 = vadd.f32 %v837, %v850
    %v852 = vpop.f32.mrf.mxu0
    %v853 = vadd.f32 %v839, %v852
    %854 = vdwg.mxu0
    %855 = vmatpush.bf16.msra.mxu0 %v628
    %856 = vmatpush.bf16.msra.mxu0 %v620
    %857 = vmatpush.bf16.msra.mxu0 %v612
    %858 = vmatpush.bf16.msra.mxu0 %v604
    %859 = vmatpush.bf16.msra.mxu0 %v596
    %860 = vmatpush.bf16.msra.mxu0 %v588
    %861 = vmatpush.bf16.msra.mxu0 %v580
    %862 = vmatpush.bf16.msra.mxu0 %v572
    %863 = vmatmul.bf16.gmra.mxu0 %v183
    %v864 = vpop.f32.mrf.mxu0
    %v865 = vadd.f32 0.0, %v864
    %v866 = vpop.f32.mrf.mxu0
    %v867 = vadd.f32 0.0, %v866
    %868 = vdwg.mxu0
    %869 = vmatpush.bf16.msra.mxu0 %v692
    %870 = vmatpush.bf16.msra.mxu0 %v684
    %871 = vmatpush.bf16.msra.mxu0 %v676
    %872 = vmatpush.bf16.msra.mxu0 %v668
    %873 = vmatpush.bf16.msra.mxu0 %v660
    %874 = vmatpush.bf16.msra.mxu0 %v652
    %875 = vmatpush.bf16.msra.mxu0 %v644
    %876 = vmatpush.bf16.msra.mxu0 %v636
    %877 = vmatmul.bf16.gmra.mxu0 %v184
    %v878 = vpop.f32.mrf.mxu0
    %v879 = vadd.f32 %v865, %v878
    %v880 = vpop.f32.mrf.mxu0
    %v881 = vadd.f32 %v867, %v880
    %882 = vdwg.mxu0
    %883 = vmatpush.bf16.msra.mxu0 %v629
    %884 = vmatpush.bf16.msra.mxu0 %v621
    %885 = vmatpush.bf16.msra.mxu0 %v613
    %886 = vmatpush.bf16.msra.mxu0 %v605
    %887 = vmatpush.bf16.msra.mxu0 %v597
    %888 = vmatpush.bf16.msra.mxu0 %v589
    %889 = vmatpush.bf16.msra.mxu0 %v581
    %890 = vmatpush.bf16.msra.mxu0 %v573
    %891 = vmatmul.bf16.gmra.mxu0 %v183
    %v892 = vpop.f32.mrf.mxu0
    %v893 = vadd.f32 0.0, %v892
    %v894 = vpop.f32.mrf.mxu0
    %v895 = vadd.f32 0.0, %v894
    %896 = vdwg.mxu0
    %897 = vmatpush.bf16.msra.mxu0 %v693
    %898 = vmatpush.bf16.msra.mxu0 %v685
    %899 = vmatpush.bf16.msra.mxu0 %v677
    %900 = vmatpush.bf16.msra.mxu0 %v669
    %901 = vmatpush.bf16.msra.mxu0 %v661
    %902 = vmatpush.bf16.msra.mxu0 %v653
    %903 = vmatpush.bf16.msra.mxu0 %v645
    %904 = vmatpush.bf16.msra.mxu0 %v637
    %905 = vmatmul.bf16.gmra.mxu0 %v184
    %v906 = vpop.f32.mrf.mxu0
    %v907 = vadd.f32 %v893, %v906
    %v908 = vpop.f32.mrf.mxu0
    %v909 = vadd.f32 %v895, %v908
    %910 = vdwg.mxu0
    %911 = vmatpush.bf16.msra.mxu0 %v630
    %912 = vmatpush.bf16.msra.mxu0 %v622
    %913 = vmatpush.bf16.msra.mxu0 %v614
    %914 = vmatpush.bf16.msra.mxu0 %v606
    %915 = vmatpush.bf16.msra.mxu0 %v598
    %916 = vmatpush.bf16.msra.mxu0 %v590
    %917 = vmatpush.bf16.msra.mxu0 %v582
    %918 = vmatpush.bf16.msra.mxu0 %v574
    %919 = vmatmul.bf16.gmra.mxu0 %v183
    %v920 = vpop.f32.mrf.mxu0
    %v921 = vadd.f32 0.0, %v920
    %v922 = vpop.f32.mrf.mxu0
    %v923 = vadd.f32 0.0, %v922
    %924 = vdwg.mxu0
    %925 = vmatpush.bf16.msra.mxu0 %v694
    %926 = vmatpush.bf16.msra.mxu0 %v686
    %927 = vmatpush.bf16.msra.mxu0 %v678
    %928 = vmatpush.bf16.msra.mxu0 %v670
    %929 = vmatpush.bf16.msra.mxu0 %v662
    %930 = vmatpush.bf16.msra.mxu0 %v654
    %931 = vmatpush.bf16.msra.mxu0 %v646
    %932 = vmatpush.bf16.msra.mxu0 %v638
    %933 = vmatmul.bf16.gmra.mxu0 %v184
    %v934 = vpop.f32.mrf.mxu0
    %v935 = vadd.f32 %v921, %v934
    %v936 = vpop.f32.mrf.mxu0
    %v937 = vadd.f32 %v923, %v936
    %938 = vdwg.mxu0
    %939 = vmatpush.bf16.msra.mxu0 %v631
    %940 = vmatpush.bf16.msra.mxu0 %v623
    %941 = vmatpush.bf16.msra.mxu0 %v615
    %942 = vmatpush.bf16.msra.mxu0 %v607
    %943 = vmatpush.bf16.msra.mxu0 %v599
    %944 = vmatpush.bf16.msra.mxu0 %v591
    %945 = vmatpush.bf16.msra.mxu0 %v583
    %946 = vmatpush.bf16.msra.mxu0 %v575
    %947 = vmatmul.bf16.gmra.mxu0 %v183
    %v948 = vpop.f32.mrf.mxu0
    %v949 = vadd.f32 0.0, %v948
    %v950 = vpop.f32.mrf.mxu0
    %v951 = vadd.f32 0.0, %v950
    %952 = vdwg.mxu0
    %953 = vmatpush.bf16.msra.mxu0 %v695
    %954 = vmatpush.bf16.msra.mxu0 %v687
    %955 = vmatpush.bf16.msra.mxu0 %v679
    %956 = vmatpush.bf16.msra.mxu0 %v671
    %957 = vmatpush.bf16.msra.mxu0 %v663
    %958 = vmatpush.bf16.msra.mxu0 %v655
    %959 = vmatpush.bf16.msra.mxu0 %v647
    %960 = vmatpush.bf16.msra.mxu0 %v639
    %961 = vmatmul.bf16.gmra.mxu0 %v184
    %v962 = vpop.f32.mrf.mxu0
    %v963 = vadd.f32 %v949, %v962
    %v964 = vpop.f32.mrf.mxu0
    %v965 = vadd.f32 %v951, %v964
    %966 = vdwg.mxu0
    %967 = vmatpush.bf16.msra.mxu0 %v632
    %968 = vmatpush.bf16.msra.mxu0 %v624
    %969 = vmatpush.bf16.msra.mxu0 %v616
    %970 = vmatpush.bf16.msra.mxu0 %v608
    %971 = vmatpush.bf16.msra.mxu0 %v600
    %972 = vmatpush.bf16.msra.mxu0 %v592
    %973 = vmatpush.bf16.msra.mxu0 %v584
    %974 = vmatpush.bf16.msra.mxu0 %v576
    %975 = vmatmul.bf16.gmra.mxu0 %v183
    %v976 = vpop.f32.mrf.mxu0
    %v977 = vadd.f32 0.0, %v976
    %v978 = vpop.f32.mrf.mxu0
    %v979 = vadd.f32 0.0, %v978
    %980 = vdwg.mxu0
    %981 = vmatpush.bf16.msra.mxu0 %v696
    %982 = vmatpush.bf16.msra.mxu0 %v688
    %983 = vmatpush.bf16.msra.mxu0 %v680
    %984 = vmatpush.bf16.msra.mxu0 %v672
    %985 = vmatpush.bf16.msra.mxu0 %v664
    %986 = vmatpush.bf16.msra.mxu0 %v656
    %987 = vmatpush.bf16.msra.mxu0 %v648
    %988 = vmatpush.bf16.msra.mxu0 %v640
    %989 = vmatmul.bf16.gmra.mxu0 %v184
    %v990 = vpop.f32.mrf.mxu0
    %v991 = vadd.f32 %v977, %v990
    %v992 = vpop.f32.mrf.mxu0
    %v993 = vadd.f32 %v979, %v992
    %994 = vdwg.mxu0
    %995 = vmatpush.bf16.msra.mxu0 %v633
    %996 = vmatpush.bf16.msra.mxu0 %v625
    %997 = vmatpush.bf16.msra.mxu0 %v617
    %998 = vmatpush.bf16.msra.mxu0 %v609
    %999 = vmatpush.bf16.msra.mxu0 %v601
    %1000 = vmatpush.bf16.msra.mxu0 %v593
    %1001 = vmatpush.bf16.msra.mxu0 %v585
    %1002 = vmatpush.bf16.msra.mxu0 %v577
    %1003 = vmatmul.bf16.gmra.mxu0 %v183
    %v1004 = vpop.f32.mrf.mxu0
    %v1005 = vadd.f32 0.0, %v1004
    %v1006 = vpop.f32.mrf.mxu0
    %v1007 = vadd.f32 0.0, %v1006
    %1008 = vdwg.mxu0
    %1009 = vmatpush.bf16.msra.mxu0 %v697
    %1010 = vmatpush.bf16.msra.mxu0 %v689
    %1011 = vmatpush.bf16.msra.mxu0 %v681
    %1012 = vmatpush.bf16.msra.mxu0 %v673
    %1013 = vmatpush.bf16.msra.mxu0 %v665
    %1014 = vmatpush.bf16.msra.mxu0 %v657
    %1015 = vmatpush.bf16.msra.mxu0 %v649
    %1016 = vmatpush.bf16.msra.mxu0 %v641
    %1017 = vmatmul.bf16.gmra.mxu0 %v184
    %v1018 = vpop.f32.mrf.mxu0
    %v1019 = vadd.f32 %v1005, %v1018
    %v1020 = vpop.f32.mrf.mxu0
    %v1021 = vadd.f32 %v1007, %v1020
    %1022 = vdwg.mxu0
    %1023 = vmatpush.bf16.msra.mxu0 %v634
    %1024 = vmatpush.bf16.msra.mxu0 %v626
    %1025 = vmatpush.bf16.msra.mxu0 %v618
    %1026 = vmatpush.bf16.msra.mxu0 %v610
    %1027 = vmatpush.bf16.msra.mxu0 %v602
    %1028 = vmatpush.bf16.msra.mxu0 %v594
    %1029 = vmatpush.bf16.msra.mxu0 %v586
    %1030 = vmatpush.bf16.msra.mxu0 %v578
    %1031 = vmatmul.bf16.gmra.mxu0 %v183
    %v1032 = vpop.f32.mrf.mxu0
    %v1033 = vadd.f32 0.0, %v1032
    %v1034 = vpop.f32.mrf.mxu0
    %v1035 = vadd.f32 0.0, %v1034
    %1036 = vdwg.mxu0
    %1037 = vmatpush.bf16.msra.mxu0 %v698
    %1038 = vmatpush.bf16.msra.mxu0 %v690
    %1039 = vmatpush.bf16.msra.mxu0 %v682
    %1040 = vmatpush.bf16.msra.mxu0 %v674
    %1041 = vmatpush.bf16.msra.mxu0 %v666
    %1042 = vmatpush.bf16.msra.mxu0 %v658
    %1043 = vmatpush.bf16.msra.mxu0 %v650
    %1044 = vmatpush.bf16.msra.mxu0 %v642
    %1045 = vmatmul.bf16.gmra.mxu0 %v184
    %v1046 = vpop.f32.mrf.mxu0
    %v1047 = vadd.f32 %v1033, %v1046
    %v1048 = vpop.f32.mrf.mxu0
    %v1049 = vadd.f32 %v1035, %v1048
    %1050 = vdwg.mxu0
    %v1051 = vmul.f32 %v851, 0.5
    %v1052 = vmul.f32 %v879, 0.5
    %v1053 = vmul.f32 %v907, 0.5
    %v1054 = vmul.f32 %v935, 0.5
    %v1055 = vmul.f32 %v963, 0.5
    %v1056 = vmul.f32 %v991, 0.5
    %v1057 = vmul.f32 %v1019, 0.5
    %v1058 = vmul.f32 %v1047, 0.5
    %v1059 = vmul.f32 %v853, 0.5
    %v1060 = vmul.f32 %v881, 0.5
    %v1061 = vmul.f32 %v909, 0.5
    %v1062 = vmul.f32 %v937, 0.5
    %v1063 = vmul.f32 %v965, 0.5
    %v1064 = vmul.f32 %v993, 0.5
    %v1065 = vmul.f32 %v1021, 0.5
    %v1066 = vmul.f32 %v1049, 0.5
    %v1067 = vmul.f32 %v851, 0.70710677
    %v1068 = vmul.f32 %v879, 0.70710677
    %v1069 = vmul.f32 %v907, 0.70710677
    %v1070 = vmul.f32 %v935, 0.70710677
    %v1071 = vmul.f32 %v963, 0.70710677
    %v1072 = vmul.f32 %v991, 0.70710677
    %v1073 = vmul.f32 %v1019, 0.70710677
    %v1074 = vmul.f32 %v1047, 0.70710677
    %v1075 = vmul.f32 %v853, 0.70710677
    %v1076 = vmul.f32 %v881, 0.70710677
    %v1077 = vmul.f32 %v909, 0.70710677
    %v1078 = vmul.f32 %v937, 0.70710677
    %v1079 = vmul.f32 %v965, 0.70710677
    %v1080 = vmul.f32 %v993, 0.70710677
    %v1081 = vmul.f32 %v1021, 0.70710677
    %v1082 = vmul.f32 %v1049, 0.70710677
    %v1083 = vmul.f32 %v1067, %v1067
    %v1084 = vmin.f32 16.0, %v1083
    %v1085 = vmul.f32 %v1084, 2.1237322e-06
    %v1086 = vadd.f32 %v1085, 0.00028619796
    %v1087 = vmul.f32 %v1084, %v1086
    %v1088 = vadd.f32 %v1087, 0.0036580483
    %v1089 = vmul.f32 %v1084, %v1088
    %v1090 = vadd.f32 %v1089, 0.05243302
    %v1091 = vmul.f32 %v1084, %v1090
    %v1092 = vadd.f32 %v1091, 0.18741608
    %v1093 = vmul.f32 %v1084, %v1092
    %v1094 = vadd.f32 %v1093, 1.1283791
    %v1095 = vmul.f32 %v1067, %v1094
    %v1096 = vmul.f32 %v1084, 3.8918573e-05
    %v1097 = vadd.f32 %v1096, 0.001143296
    %v1098 = vmul.f32 %v1084, %v1097
    %v1099 = vadd.f32 %v1098, 0.014752088
    %v1100 = vmul.f32 %v1084, %v1099
    %v1101 = vadd.f32 %v1100, 0.112945676
    %v1102 = vmul.f32 %v1084, %v1101
    %v1103 = vadd.f32 %v1102, 0.4994258
    %v1104 = vmul.f32 %v1084, %v1103
    %v1105 = vadd.f32 %v1104, 1.0
    %v1106 = vrcp.pop %v1105
    %v1107 = vmul.f32 %v1105, %v1106
    %v1108 = vsub.f32 1.0, %v1107
    %v1109 = vmul.f32 %v1106, %v1108
    %v1110 = vadd.f32 %v1106, %v1109
    %vm1111 = vweird.f32 %v1105
    %vm1112 = vweird.f32 %v1106
    %vm1113 = vmor %vm1111, %vm1112
    %v1114 = vsel %vm1113, %v1106, %v1110
    %v1115 = vand.u32 2147483647, %v1105
    %vm1116 = vcmp.eq.f32.partialorder %v1115, 8.507059e+37
    %v1117 = vand.u32 %v1105, 2147483648
    %v1118 = vor.u32 1.1754944e-38, %v1117
    %v1119 = vsel %vm1116, %v1118, %v1114
    %v1120 = vmul.f32 %v1095, %v1119
    %v1121 = vmin.f32 %v1120, 1.0
    %v1122 = vmax.f32 %v1121, -1.0
    %v1123 = vmul.f32 %v1068, %v1068
    %v1124 = vmin.f32 16.0, %v1123
    %v1125 = vmul.f32 %v1124, 2.1237322e-06
    %v1126 = vadd.f32 %v1125, 0.00028619796
    %v1127 = vmul.f32 %v1124, %v1126
    %v1128 = vadd.f32 %v1127, 0.0036580483
    %v1129 = vmul.f32 %v1124, %v1128
    %v1130 = vadd.f32 %v1129, 0.05243302
    %v1131 = vmul.f32 %v1124, %v1130
    %v1132 = vadd.f32 %v1131, 0.18741608
    %v1133 = vmul.f32 %v1124, %v1132
    %v1134 = vadd.f32 %v1133, 1.1283791
    %v1135 = vmul.f32 %v1068, %v1134
    %v1136 = vmul.f32 %v1124, 3.8918573e-05
    %v1137 = vadd.f32 %v1136, 0.001143296
    %v1138 = vmul.f32 %v1124, %v1137
    %v1139 = vadd.f32 %v1138, 0.014752088
    %v1140 = vmul.f32 %v1124, %v1139
    %v1141 = vadd.f32 %v1140, 0.112945676
    %v1142 = vmul.f32 %v1124, %v1141
    %v1143 = vadd.f32 %v1142, 0.4994258
    %v1144 = vmul.f32 %v1124, %v1143
    %v1145 = vadd.f32 %v1144, 1.0
    %v1146 = vrcp.pop %v1145
    %v1147 = vmul.f32 %v1145, %v1146
    %v1148 = vsub.f32 1.0, %v1147
    %v1149 = vmul.f32 %v1146, %v1148
    %v1150 = vadd.f32 %v1146, %v1149
    %vm1151 = vweird.f32 %v1145
    %vm1152 = vweird.f32 %v1146
    %vm1153 = vmor %vm1151, %vm1152
    %v1154 = vsel %vm1153, %v1146, %v1150
    %v1155 = vand.u32 2147483647, %v1145
    %vm1156 = vcmp.eq.f32.partialorder %v1155, 8.507059e+37
    %v1157 = vand.u32 %v1145, 2147483648
    %v1158 = vor.u32 1.1754944e-38, %v1157
    %v1159 = vsel %vm1156, %v1158, %v1154
    %v1160 = vmul.f32 %v1135, %v1159
    %v1161 = vmin.f32 %v1160, 1.0
    %v1162 = vmax.f32 %v1161, -1.0
    %v1163 = vmul.f32 %v1069, %v1069
    %v1164 = vmin.f32 16.0, %v1163
    %v1165 = vmul.f32 %v1164, 2.1237322e-06
    %v1166 = vadd.f32 %v1165, 0.00028619796
    %v1167 = vmul.f32 %v1164, %v1166
    %v1168 = vadd.f32 %v1167, 0.0036580483
    %v1169 = vmul.f32 %v1164, %v1168
    %v1170 = vadd.f32 %v1169, 0.05243302
    %v1171 = vmul.f32 %v1164, %v1170
    %v1172 = vadd.f32 %v1171, 0.18741608
    %v1173 = vmul.f32 %v1164, %v1172
    %v1174 = vadd.f32 %v1173, 1.1283791
    %v1175 = vmul.f32 %v1069, %v1174
    %v1176 = vmul.f32 %v1164, 3.8918573e-05
    %v1177 = vadd.f32 %v1176, 0.001143296
    %v1178 = vmul.f32 %v1164, %v1177
    %v1179 = vadd.f32 %v1178, 0.014752088
    %v1180 = vmul.f32 %v1164, %v1179
    %v1181 = vadd.f32 %v1180, 0.112945676
    %v1182 = vmul.f32 %v1164, %v1181
    %v1183 = vadd.f32 %v1182, 0.4994258
    %v1184 = vmul.f32 %v1164, %v1183
    %v1185 = vadd.f32 %v1184, 1.0
    %v1186 = vrcp.pop %v1185
    %v1187 = vmul.f32 %v1185, %v1186
    %v1188 = vsub.f32 1.0, %v1187
    %v1189 = vmul.f32 %v1186, %v1188
    %v1190 = vadd.f32 %v1186, %v1189
    %vm1191 = vweird.f32 %v1185
    %vm1192 = vweird.f32 %v1186
    %vm1193 = vmor %vm1191, %vm1192
    %v1194 = vsel %vm1193, %v1186, %v1190
    %v1195 = vand.u32 2147483647, %v1185
    %vm1196 = vcmp.eq.f32.partialorder %v1195, 8.507059e+37
    %v1197 = vand.u32 %v1185, 2147483648
    %v1198 = vor.u32 1.1754944e-38, %v1197
    %v1199 = vsel %vm1196, %v1198, %v1194
    %v1200 = vmul.f32 %v1175, %v1199
    %v1201 = vmin.f32 %v1200, 1.0
    %v1202 = vmax.f32 %v1201, -1.0
    %v1203 = vmul.f32 %v1070, %v1070
    %v1204 = vmin.f32 16.0, %v1203
    %v1205 = vmul.f32 %v1204, 2.1237322e-06
    %v1206 = vadd.f32 %v1205, 0.00028619796
    %v1207 = vmul.f32 %v1204, %v1206
    %v1208 = vadd.f32 %v1207, 0.0036580483
    %v1209 = vmul.f32 %v1204, %v1208
    %v1210 = vadd.f32 %v1209, 0.05243302
    %v1211 = vmul.f32 %v1204, %v1210
    %v1212 = vadd.f32 %v1211, 0.18741608
    %v1213 = vmul.f32 %v1204, %v1212
    %v1214 = vadd.f32 %v1213, 1.1283791
    %v1215 = vmul.f32 %v1070, %v1214
    %v1216 = vmul.f32 %v1204, 3.8918573e-05
    %v1217 = vadd.f32 %v1216, 0.001143296
    %v1218 = vmul.f32 %v1204, %v1217
    %v1219 = vadd.f32 %v1218, 0.014752088
    %v1220 = vmul.f32 %v1204, %v1219
    %v1221 = vadd.f32 %v1220, 0.112945676
    %v1222 = vmul.f32 %v1204, %v1221
    %v1223 = vadd.f32 %v1222, 0.4994258
    %v1224 = vmul.f32 %v1204, %v1223
    %v1225 = vadd.f32 %v1224, 1.0
    %v1226 = vrcp.pop %v1225
    %v1227 = vmul.f32 %v1225, %v1226
    %v1228 = vsub.f32 1.0, %v1227
    %v1229 = vmul.f32 %v1226, %v1228
    %v1230 = vadd.f32 %v1226, %v1229
    %vm1231 = vweird.f32 %v1225
    %vm1232 = vweird.f32 %v1226
    %vm1233 = vmor %vm1231, %vm1232
    %v1234 = vsel %vm1233, %v1226, %v1230
    %v1235 = vand.u32 2147483647, %v1225
    %vm1236 = vcmp.eq.f32.partialorder %v1235, 8.507059e+37
    %v1237 = vand.u32 %v1225, 2147483648
    %v1238 = vor.u32 1.1754944e-38, %v1237
    %v1239 = vsel %vm1236, %v1238, %v1234
    %v1240 = vmul.f32 %v1215, %v1239
    %v1241 = vmin.f32 %v1240, 1.0
    %v1242 = vmax.f32 %v1241, -1.0
    %v1243 = vmul.f32 %v1071, %v1071
    %v1244 = vmin.f32 16.0, %v1243
    %v1245 = vmul.f32 %v1244, 2.1237322e-06
    %v1246 = vadd.f32 %v1245, 0.00028619796
    %v1247 = vmul.f32 %v1244, %v1246
    %v1248 = vadd.f32 %v1247, 0.0036580483
    %v1249 = vmul.f32 %v1244, %v1248
    %v1250 = vadd.f32 %v1249, 0.05243302
    %v1251 = vmul.f32 %v1244, %v1250
    %v1252 = vadd.f32 %v1251, 0.18741608
    %v1253 = vmul.f32 %v1244, %v1252
    %v1254 = vadd.f32 %v1253, 1.1283791
    %v1255 = vmul.f32 %v1071, %v1254
    %v1256 = vmul.f32 %v1244, 3.8918573e-05
    %v1257 = vadd.f32 %v1256, 0.001143296
    %v1258 = vmul.f32 %v1244, %v1257
    %v1259 = vadd.f32 %v1258, 0.014752088
    %v1260 = vmul.f32 %v1244, %v1259
    %v1261 = vadd.f32 %v1260, 0.112945676
    %v1262 = vmul.f32 %v1244, %v1261
    %v1263 = vadd.f32 %v1262, 0.4994258
    %v1264 = vmul.f32 %v1244, %v1263
    %v1265 = vadd.f32 %v1264, 1.0
    %v1266 = vrcp.pop %v1265
    %v1267 = vmul.f32 %v1265, %v1266
    %v1268 = vsub.f32 1.0, %v1267
    %v1269 = vmul.f32 %v1266, %v1268
    %v1270 = vadd.f32 %v1266, %v1269
    %vm1271 = vweird.f32 %v1265
    %vm1272 = vweird.f32 %v1266
    %vm1273 = vmor %vm1271, %vm1272
    %v1274 = vsel %vm1273, %v1266, %v1270
    %v1275 = vand.u32 2147483647, %v1265
    %vm1276 = vcmp.eq.f32.partialorder %v1275, 8.507059e+37
    %v1277 = vand.u32 %v1265, 2147483648
    %v1278 = vor.u32 1.1754944e-38, %v1277
    %v1279 = vsel %vm1276, %v1278, %v1274
    %v1280 = vmul.f32 %v1255, %v1279
    %v1281 = vmin.f32 %v1280, 1.0
    %v1282 = vmax.f32 %v1281, -1.0
    %v1283 = vmul.f32 %v1072, %v1072
    %v1284 = vmin.f32 16.0, %v1283
    %v1285 = vmul.f32 %v1284, 2.1237322e-06
    %v1286 = vadd.f32 %v1285, 0.00028619796
    %v1287 = vmul.f32 %v1284, %v1286
    %v1288 = vadd.f32 %v1287, 0.0036580483
    %v1289 = vmul.f32 %v1284, %v1288
    %v1290 = vadd.f32 %v1289, 0.05243302
    %v1291 = vmul.f32 %v1284, %v1290
    %v1292 = vadd.f32 %v1291, 0.18741608
    %v1293 = vmul.f32 %v1284, %v1292
    %v1294 = vadd.f32 %v1293, 1.1283791
    %v1295 = vmul.f32 %v1072, %v1294
    %v1296 = vmul.f32 %v1284, 3.8918573e-05
    %v1297 = vadd.f32 %v1296, 0.001143296
    %v1298 = vmul.f32 %v1284, %v1297
    %v1299 = vadd.f32 %v1298, 0.014752088
    %v1300 = vmul.f32 %v1284, %v1299
    %v1301 = vadd.f32 %v1300, 0.112945676
    %v1302 = vmul.f32 %v1284, %v1301
    %v1303 = vadd.f32 %v1302, 0.4994258
    %v1304 = vmul.f32 %v1284, %v1303
    %v1305 = vadd.f32 %v1304, 1.0
    %v1306 = vrcp.pop %v1305
    %v1307 = vmul.f32 %v1305, %v1306
    %v1308 = vsub.f32 1.0, %v1307
    %v1309 = vmul.f32 %v1306, %v1308
    %v1310 = vadd.f32 %v1306, %v1309
    %vm1311 = vweird.f32 %v1305
    %vm1312 = vweird.f32 %v1306
    %vm1313 = vmor %vm1311, %vm1312
    %v1314 = vsel %vm1313, %v1306, %v1310
    %v1315 = vand.u32 2147483647, %v1305
    %vm1316 = vcmp.eq.f32.partialorder %v1315, 8.507059e+37
    %v1317 = vand.u32 %v1305, 2147483648
    %v1318 = vor.u32 1.1754944e-38, %v1317
    %v1319 = vsel %vm1316, %v1318, %v1314
    %v1320 = vmul.f32 %v1295, %v1319
    %v1321 = vmin.f32 %v1320, 1.0
    %v1322 = vmax.f32 %v1321, -1.0
    %v1323 = vmul.f32 %v1073, %v1073
    %v1324 = vmin.f32 16.0, %v1323
    %v1325 = vmul.f32 %v1324, 2.1237322e-06
    %v1326 = vadd.f32 %v1325, 0.00028619796
    %v1327 = vmul.f32 %v1324, %v1326
    %v1328 = vadd.f32 %v1327, 0.0036580483
    %v1329 = vmul.f32 %v1324, %v1328
    %v1330 = vadd.f32 %v1329, 0.05243302
    %v1331 = vmul.f32 %v1324, %v1330
    %v1332 = vadd.f32 %v1331, 0.18741608
    %v1333 = vmul.f32 %v1324, %v1332
    %v1334 = vadd.f32 %v1333, 1.1283791
    %v1335 = vmul.f32 %v1073, %v1334
    %v1336 = vmul.f32 %v1324, 3.8918573e-05
    %v1337 = vadd.f32 %v1336, 0.001143296
    %v1338 = vmul.f32 %v1324, %v1337
    %v1339 = vadd.f32 %v1338, 0.014752088
    %v1340 = vmul.f32 %v1324, %v1339
    %v1341 = vadd.f32 %v1340, 0.112945676
    %v1342 = vmul.f32 %v1324, %v1341
    %v1343 = vadd.f32 %v1342, 0.4994258
    %v1344 = vmul.f32 %v1324, %v1343
    %v1345 = vadd.f32 %v1344, 1.0
    %v1346 = vrcp.pop %v1345
    %v1347 = vmul.f32 %v1345, %v1346
    %v1348 = vsub.f32 1.0, %v1347
    %v1349 = vmul.f32 %v1346, %v1348
    %v1350 = vadd.f32 %v1346, %v1349
    %vm1351 = vweird.f32 %v1345
    %vm1352 = vweird.f32 %v1346
    %vm1353 = vmor %vm1351, %vm1352
    %v1354 = vsel %vm1353, %v1346, %v1350
    %v1355 = vand.u32 2147483647, %v1345
    %vm1356 = vcmp.eq.f32.partialorder %v1355, 8.507059e+37
    %v1357 = vand.u32 %v1345, 2147483648
    %v1358 = vor.u32 1.1754944e-38, %v1357
    %v1359 = vsel %vm1356, %v1358, %v1354
    %v1360 = vmul.f32 %v1335, %v1359
    %v1361 = vmin.f32 %v1360, 1.0
    %v1362 = vmax.f32 %v1361, -1.0
    %v1363 = vmul.f32 %v1074, %v1074
    %v1364 = vmin.f32 16.0, %v1363
    %v1365 = vmul.f32 %v1364, 2.1237322e-06
    %v1366 = vadd.f32 %v1365, 0.00028619796
    %v1367 = vmul.f32 %v1364, %v1366
    %v1368 = vadd.f32 %v1367, 0.0036580483
    %v1369 = vmul.f32 %v1364, %v1368
    %v1370 = vadd.f32 %v1369, 0.05243302
    %v1371 = vmul.f32 %v1364, %v1370
    %v1372 = vadd.f32 %v1371, 0.18741608
    %v1373 = vmul.f32 %v1364, %v1372
    %v1374 = vadd.f32 %v1373, 1.1283791
    %v1375 = vmul.f32 %v1074, %v1374
    %v1376 = vmul.f32 %v1364, 3.8918573e-05
    %v1377 = vadd.f32 %v1376, 0.001143296
    %v1378 = vmul.f32 %v1364, %v1377
    %v1379 = vadd.f32 %v1378, 0.014752088
    %v1380 = vmul.f32 %v1364, %v1379
    %v1381 = vadd.f32 %v1380, 0.112945676
    %v1382 = vmul.f32 %v1364, %v1381
    %v1383 = vadd.f32 %v1382, 0.4994258
    %v1384 = vmul.f32 %v1364, %v1383
    %v1385 = vadd.f32 %v1384, 1.0
    %v1386 = vrcp.pop %v1385
    %v1387 = vmul.f32 %v1385, %v1386
    %v1388 = vsub.f32 1.0, %v1387
    %v1389 = vmul.f32 %v1386, %v1388
    %v1390 = vadd.f32 %v1386, %v1389
    %vm1391 = vweird.f32 %v1385
    %vm1392 = vweird.f32 %v1386
    %vm1393 = vmor %vm1391, %vm1392
    %v1394 = vsel %vm1393, %v1386, %v1390
    %v1395 = vand.u32 2147483647, %v1385
    %vm1396 = vcmp.eq.f32.partialorder %v1395, 8.507059e+37
    %v1397 = vand.u32 %v1385, 2147483648
    %v1398 = vor.u32 1.1754944e-38, %v1397
    %v1399 = vsel %vm1396, %v1398, %v1394
    %v1400 = vmul.f32 %v1375, %v1399
    %v1401 = vmin.f32 %v1400, 1.0
    %v1402 = vmax.f32 %v1401, -1.0
    %v1403 = vmul.f32 %v1075, %v1075
    %v1404 = vmin.f32 16.0, %v1403
    %v1405 = vmul.f32 %v1404, 2.1237322e-06
    %v1406 = vadd.f32 %v1405, 0.00028619796
    %v1407 = vmul.f32 %v1404, %v1406
    %v1408 = vadd.f32 %v1407, 0.0036580483
    %v1409 = vmul.f32 %v1404, %v1408
    %v1410 = vadd.f32 %v1409, 0.05243302
    %v1411 = vmul.f32 %v1404, %v1410
    %v1412 = vadd.f32 %v1411, 0.18741608
    %v1413 = vmul.f32 %v1404, %v1412
    %v1414 = vadd.f32 %v1413, 1.1283791
    %v1415 = vmul.f32 %v1075, %v1414
    %v1416 = vmul.f32 %v1404, 3.8918573e-05
    %v1417 = vadd.f32 %v1416, 0.001143296
    %v1418 = vmul.f32 %v1404, %v1417
    %v1419 = vadd.f32 %v1418, 0.014752088
    %v1420 = vmul.f32 %v1404, %v1419
    %v1421 = vadd.f32 %v1420, 0.112945676
    %v1422 = vmul.f32 %v1404, %v1421
    %v1423 = vadd.f32 %v1422, 0.4994258
    %v1424 = vmul.f32 %v1404, %v1423
    %v1425 = vadd.f32 %v1424, 1.0
    %v1426 = vrcp.pop %v1425
    %v1427 = vmul.f32 %v1425, %v1426
    %v1428 = vsub.f32 1.0, %v1427
    %v1429 = vmul.f32 %v1426, %v1428
    %v1430 = vadd.f32 %v1426, %v1429
    %vm1431 = vweird.f32 %v1425
    %vm1432 = vweird.f32 %v1426
    %vm1433 = vmor %vm1431, %vm1432
    %v1434 = vsel %vm1433, %v1426, %v1430
    %v1435 = vand.u32 2147483647, %v1425
    %vm1436 = vcmp.eq.f32.partialorder %v1435, 8.507059e+37
    %v1437 = vand.u32 %v1425, 2147483648
    %v1438 = vor.u32 1.1754944e-38, %v1437
    %v1439 = vsel %vm1436, %v1438, %v1434
    %v1440 = vmul.f32 %v1415, %v1439
    %v1441 = vmin.f32 %v1440, 1.0
    %v1442 = vmax.f32 %v1441, -1.0
    %v1443 = vmul.f32 %v1076, %v1076
    %v1444 = vmin.f32 16.0, %v1443
    %v1445 = vmul.f32 %v1444, 2.1237322e-06
    %v1446 = vadd.f32 %v1445, 0.00028619796
    %v1447 = vmul.f32 %v1444, %v1446
    %v1448 = vadd.f32 %v1447, 0.0036580483
    %v1449 = vmul.f32 %v1444, %v1448
    %v1450 = vadd.f32 %v1449, 0.05243302
    %v1451 = vmul.f32 %v1444, %v1450
    %v1452 = vadd.f32 %v1451, 0.18741608
    %v1453 = vmul.f32 %v1444, %v1452
    %v1454 = vadd.f32 %v1453, 1.1283791
    %v1455 = vmul.f32 %v1076, %v1454
    %v1456 = vmul.f32 %v1444, 3.8918573e-05
    %v1457 = vadd.f32 %v1456, 0.001143296
    %v1458 = vmul.f32 %v1444, %v1457
    %v1459 = vadd.f32 %v1458, 0.014752088
    %v1460 = vmul.f32 %v1444, %v1459
    %v1461 = vadd.f32 %v1460, 0.112945676
    %v1462 = vmul.f32 %v1444, %v1461
    %v1463 = vadd.f32 %v1462, 0.4994258
    %v1464 = vmul.f32 %v1444, %v1463
    %v1465 = vadd.f32 %v1464, 1.0
    %v1466 = vrcp.pop %v1465
    %v1467 = vmul.f32 %v1465, %v1466
    %v1468 = vsub.f32 1.0, %v1467
    %v1469 = vmul.f32 %v1466, %v1468
    %v1470 = vadd.f32 %v1466, %v1469
    %vm1471 = vweird.f32 %v1465
    %vm1472 = vweird.f32 %v1466
    %vm1473 = vmor %vm1471, %vm1472
    %v1474 = vsel %vm1473, %v1466, %v1470
    %v1475 = vand.u32 2147483647, %v1465
    %vm1476 = vcmp.eq.f32.partialorder %v1475, 8.507059e+37
    %v1477 = vand.u32 %v1465, 2147483648
    %v1478 = vor.u32 1.1754944e-38, %v1477
    %v1479 = vsel %vm1476, %v1478, %v1474
    %v1480 = vmul.f32 %v1455, %v1479
    %v1481 = vmin.f32 %v1480, 1.0
    %v1482 = vmax.f32 %v1481, -1.0
    %v1483 = vmul.f32 %v1077, %v1077
    %v1484 = vmin.f32 16.0, %v1483
    %v1485 = vmul.f32 %v1484, 2.1237322e-06
    %v1486 = vadd.f32 %v1485, 0.00028619796
    %v1487 = vmul.f32 %v1484, %v1486
    %v1488 = vadd.f32 %v1487, 0.0036580483
    %v1489 = vmul.f32 %v1484, %v1488
    %v1490 = vadd.f32 %v1489, 0.05243302
    %v1491 = vmul.f32 %v1484, %v1490
    %v1492 = vadd.f32 %v1491, 0.18741608
    %v1493 = vmul.f32 %v1484, %v1492
    %v1494 = vadd.f32 %v1493, 1.1283791
    %v1495 = vmul.f32 %v1077, %v1494
    %v1496 = vmul.f32 %v1484, 3.8918573e-05
    %v1497 = vadd.f32 %v1496, 0.001143296
    %v1498 = vmul.f32 %v1484, %v1497
    %v1499 = vadd.f32 %v1498, 0.014752088
    %v1500 = vmul.f32 %v1484, %v1499
    %v1501 = vadd.f32 %v1500, 0.112945676
    %v1502 = vmul.f32 %v1484, %v1501
    %v1503 = vadd.f32 %v1502, 0.4994258
    %v1504 = vmul.f32 %v1484, %v1503
    %v1505 = vadd.f32 %v1504, 1.0
    %v1506 = vrcp.pop %v1505
    %v1507 = vmul.f32 %v1505, %v1506
    %v1508 = vsub.f32 1.0, %v1507
    %v1509 = vmul.f32 %v1506, %v1508
    %v1510 = vadd.f32 %v1506, %v1509
    %vm1511 = vweird.f32 %v1505
    %vm1512 = vweird.f32 %v1506
    %vm1513 = vmor %vm1511, %vm1512
    %v1514 = vsel %vm1513, %v1506, %v1510
    %v1515 = vand.u32 2147483647, %v1505
    %vm1516 = vcmp.eq.f32.partialorder %v1515, 8.507059e+37
    %v1517 = vand.u32 %v1505, 2147483648
    %v1518 = vor.u32 1.1754944e-38, %v1517
    %v1519 = vsel %vm1516, %v1518, %v1514
    %v1520 = vmul.f32 %v1495, %v1519
    %v1521 = vmin.f32 %v1520, 1.0
    %v1522 = vmax.f32 %v1521, -1.0
    %v1523 = vmul.f32 %v1078, %v1078
    %v1524 = vmin.f32 16.0, %v1523
    %v1525 = vmul.f32 %v1524, 2.1237322e-06
    %v1526 = vadd.f32 %v1525, 0.00028619796
    %v1527 = vmul.f32 %v1524, %v1526
    %v1528 = vadd.f32 %v1527, 0.0036580483
    %v1529 = vmul.f32 %v1524, %v1528
    %v1530 = vadd.f32 %v1529, 0.05243302
    %v1531 = vmul.f32 %v1524, %v1530
    %v1532 = vadd.f32 %v1531, 0.18741608
    %v1533 = vmul.f32 %v1524, %v1532
    %v1534 = vadd.f32 %v1533, 1.1283791
    %v1535 = vmul.f32 %v1078, %v1534
    %v1536 = vmul.f32 %v1524, 3.8918573e-05
    %v1537 = vadd.f32 %v1536, 0.001143296
    %v1538 = vmul.f32 %v1524, %v1537
    %v1539 = vadd.f32 %v1538, 0.014752088
    %v1540 = vmul.f32 %v1524, %v1539
    %v1541 = vadd.f32 %v1540, 0.112945676
    %v1542 = vmul.f32 %v1524, %v1541
    %v1543 = vadd.f32 %v1542, 0.4994258
    %v1544 = vmul.f32 %v1524, %v1543
    %v1545 = vadd.f32 %v1544, 1.0
    %v1546 = vrcp.pop %v1545
    %v1547 = vmul.f32 %v1545, %v1546
    %v1548 = vsub.f32 1.0, %v1547
    %v1549 = vmul.f32 %v1546, %v1548
    %v1550 = vadd.f32 %v1546, %v1549
    %vm1551 = vweird.f32 %v1545
    %vm1552 = vweird.f32 %v1546
    %vm1553 = vmor %vm1551, %vm1552
    %v1554 = vsel %vm1553, %v1546, %v1550
    %v1555 = vand.u32 2147483647, %v1545
    %vm1556 = vcmp.eq.f32.partialorder %v1555, 8.507059e+37
    %v1557 = vand.u32 %v1545, 2147483648
    %v1558 = vor.u32 1.1754944e-38, %v1557
    %v1559 = vsel %vm1556, %v1558, %v1554
    %v1560 = vmul.f32 %v1535, %v1559
    %v1561 = vmin.f32 %v1560, 1.0
    %v1562 = vmax.f32 %v1561, -1.0
    %v1563 = vmul.f32 %v1079, %v1079
    %v1564 = vmin.f32 16.0, %v1563
    %v1565 = vmul.f32 %v1564, 2.1237322e-06
    %v1566 = vadd.f32 %v1565, 0.00028619796
    %v1567 = vmul.f32 %v1564, %v1566
    %v1568 = vadd.f32 %v1567, 0.0036580483
    %v1569 = vmul.f32 %v1564, %v1568
    %v1570 = vadd.f32 %v1569, 0.05243302
    %v1571 = vmul.f32 %v1564, %v1570
    %v1572 = vadd.f32 %v1571, 0.18741608
    %v1573 = vmul.f32 %v1564, %v1572
    %v1574 = vadd.f32 %v1573, 1.1283791
    %v1575 = vmul.f32 %v1079, %v1574
    %v1576 = vmul.f32 %v1564, 3.8918573e-05
    %v1577 = vadd.f32 %v1576, 0.001143296
    %v1578 = vmul.f32 %v1564, %v1577
    %v1579 = vadd.f32 %v1578, 0.014752088
    %v1580 = vmul.f32 %v1564, %v1579
    %v1581 = vadd.f32 %v1580, 0.112945676
    %v1582 = vmul.f32 %v1564, %v1581
    %v1583 = vadd.f32 %v1582, 0.4994258
    %v1584 = vmul.f32 %v1564, %v1583
    %v1585 = vadd.f32 %v1584, 1.0
    %v1586 = vrcp.pop %v1585
    %v1587 = vmul.f32 %v1585, %v1586
    %v1588 = vsub.f32 1.0, %v1587
    %v1589 = vmul.f32 %v1586, %v1588
    %v1590 = vadd.f32 %v1586, %v1589
    %vm1591 = vweird.f32 %v1585
    %vm1592 = vweird.f32 %v1586
    %vm1593 = vmor %vm1591, %vm1592
    %v1594 = vsel %vm1593, %v1586, %v1590
    %v1595 = vand.u32 2147483647, %v1585
    %vm1596 = vcmp.eq.f32.partialorder %v1595, 8.507059e+37
    %v1597 = vand.u32 %v1585, 2147483648
    %v1598 = vor.u32 1.1754944e-38, %v1597
    %v1599 = vsel %vm1596, %v1598, %v1594
    %v1600 = vmul.f32 %v1575, %v1599
    %v1601 = vmin.f32 %v1600, 1.0
    %v1602 = vmax.f32 %v1601, -1.0
    %v1603 = vmul.f32 %v1080, %v1080
    %v1604 = vmin.f32 16.0, %v1603
    %v1605 = vmul.f32 %v1604, 2.1237322e-06
    %v1606 = vadd.f32 %v1605, 0.00028619796
    %v1607 = vmul.f32 %v1604, %v1606
    %v1608 = vadd.f32 %v1607, 0.0036580483
    %v1609 = vmul.f32 %v1604, %v1608
    %v1610 = vadd.f32 %v1609, 0.05243302
    %v1611 = vmul.f32 %v1604, %v1610
    %v1612 = vadd.f32 %v1611, 0.18741608
    %v1613 = vmul.f32 %v1604, %v1612
    %v1614 = vadd.f32 %v1613, 1.1283791
    %v1615 = vmul.f32 %v1080, %v1614
    %v1616 = vmul.f32 %v1604, 3.8918573e-05
    %v1617 = vadd.f32 %v1616, 0.001143296
    %v1618 = vmul.f32 %v1604, %v1617
    %v1619 = vadd.f32 %v1618, 0.014752088
    %v1620 = vmul.f32 %v1604, %v1619
    %v1621 = vadd.f32 %v1620, 0.112945676
    %v1622 = vmul.f32 %v1604, %v1621
    %v1623 = vadd.f32 %v1622, 0.4994258
    %v1624 = vmul.f32 %v1604, %v1623
    %v1625 = vadd.f32 %v1624, 1.0
    %v1626 = vrcp.pop %v1625
    %v1627 = vmul.f32 %v1625, %v1626
    %v1628 = vsub.f32 1.0, %v1627
    %v1629 = vmul.f32 %v1626, %v1628
    %v1630 = vadd.f32 %v1626, %v1629
    %vm1631 = vweird.f32 %v1625
    %vm1632 = vweird.f32 %v1626
    %vm1633 = vmor %vm1631, %vm1632
    %v1634 = vsel %vm1633, %v1626, %v1630
    %v1635 = vand.u32 2147483647, %v1625
    %vm1636 = vcmp.eq.f32.partialorder %v1635, 8.507059e+37
    %v1637 = vand.u32 %v1625, 2147483648
    %v1638 = vor.u32 1.1754944e-38, %v1637
    %v1639 = vsel %vm1636, %v1638, %v1634
    %v1640 = vmul.f32 %v1615, %v1639
    %v1641 = vmin.f32 %v1640, 1.0
    %v1642 = vmax.f32 %v1641, -1.0
    %v1643 = vmul.f32 %v1081, %v1081
    %v1644 = vmin.f32 16.0, %v1643
    %v1645 = vmul.f32 %v1644, 2.1237322e-06
    %v1646 = vadd.f32 %v1645, 0.00028619796
    %v1647 = vmul.f32 %v1644, %v1646
    %v1648 = vadd.f32 %v1647, 0.0036580483
    %v1649 = vmul.f32 %v1644, %v1648
    %v1650 = vadd.f32 %v1649, 0.05243302
    %v1651 = vmul.f32 %v1644, %v1650
    %v1652 = vadd.f32 %v1651, 0.18741608
    %v1653 = vmul.f32 %v1644, %v1652
    %v1654 = vadd.f32 %v1653, 1.1283791
    %v1655 = vmul.f32 %v1081, %v1654
    %v1656 = vmul.f32 %v1644, 3.8918573e-05
    %v1657 = vadd.f32 %v1656, 0.001143296
    %v1658 = vmul.f32 %v1644, %v1657
    %v1659 = vadd.f32 %v1658, 0.014752088
    %v1660 = vmul.f32 %v1644, %v1659
    %v1661 = vadd.f32 %v1660, 0.112945676
    %v1662 = vmul.f32 %v1644, %v1661
    %v1663 = vadd.f32 %v1662, 0.4994258
    %v1664 = vmul.f32 %v1644, %v1663
    %v1665 = vadd.f32 %v1664, 1.0
    %v1666 = vrcp.pop %v1665
    %v1667 = vmul.f32 %v1665, %v1666
    %v1668 = vsub.f32 1.0, %v1667
    %v1669 = vmul.f32 %v1666, %v1668
    %v1670 = vadd.f32 %v1666, %v1669
    %vm1671 = vweird.f32 %v1665
    %vm1672 = vweird.f32 %v1666
    %vm1673 = vmor %vm1671, %vm1672
    %v1674 = vsel %vm1673, %v1666, %v1670
    %v1675 = vand.u32 2147483647, %v1665
    %vm1676 = vcmp.eq.f32.partialorder %v1675, 8.507059e+37
    %v1677 = vand.u32 %v1665, 2147483648
    %v1678 = vor.u32 1.1754944e-38, %v1677
    %v1679 = vsel %vm1676, %v1678, %v1674
    %v1680 = vmul.f32 %v1655, %v1679
    %v1681 = vmin.f32 %v1680, 1.0
    %v1682 = vmax.f32 %v1681, -1.0
    %v1683 = vmul.f32 %v1082, %v1082
    %v1684 = vmin.f32 16.0, %v1683
    %v1685 = vmul.f32 %v1684, 2.1237322e-06
    %v1686 = vadd.f32 %v1685, 0.00028619796
    %v1687 = vmul.f32 %v1684, %v1686
    %v1688 = vadd.f32 %v1687, 0.0036580483
    %v1689 = vmul.f32 %v1684, %v1688
    %v1690 = vadd.f32 %v1689, 0.05243302
    %v1691 = vmul.f32 %v1684, %v1690
    %v1692 = vadd.f32 %v1691, 0.18741608
    %v1693 = vmul.f32 %v1684, %v1692
    %v1694 = vadd.f32 %v1693, 1.1283791
    %v1695 = vmul.f32 %v1082, %v1694
    %v1696 = vmul.f32 %v1684, 3.8918573e-05
    %v1697 = vadd.f32 %v1696, 0.001143296
    %v1698 = vmul.f32 %v1684, %v1697
    %v1699 = vadd.f32 %v1698, 0.014752088
    %v1700 = vmul.f32 %v1684, %v1699
    %v1701 = vadd.f32 %v1700, 0.112945676
    %v1702 = vmul.f32 %v1684, %v1701
    %v1703 = vadd.f32 %v1702, 0.4994258
    %v1704 = vmul.f32 %v1684, %v1703
    %v1705 = vadd.f32 %v1704, 1.0
    %v1706 = vrcp.pop %v1705
    %v1707 = vmul.f32 %v1705, %v1706
    %v1708 = vsub.f32 1.0, %v1707
    %v1709 = vmul.f32 %v1706, %v1708
    %v1710 = vadd.f32 %v1706, %v1709
    %vm1711 = vweird.f32 %v1705
    %vm1712 = vweird.f32 %v1706
    %vm1713 = vmor %vm1711, %vm1712
    %v1714 = vsel %vm1713, %v1706, %v1710
    %v1715 = vand.u32 2147483647, %v1705
    %vm1716 = vcmp.eq.f32.partialorder %v1715, 8.507059e+37
    %v1717 = vand.u32 %v1705, 2147483648
    %v1718 = vor.u32 1.1754944e-38, %v1717
    %v1719 = vsel %vm1716, %v1718, %v1714
    %v1720 = vmul.f32 %v1695, %v1719
    %v1721 = vmin.f32 %v1720, 1.0
    %v1722 = vmax.f32 %v1721, -1.0
    %v1723 = vadd.f32 %v1122, 1.0
    %v1724 = vadd.f32 %v1162, 1.0
    %v1725 = vadd.f32 %v1202, 1.0
    %v1726 = vadd.f32 %v1242, 1.0
    %v1727 = vadd.f32 %v1282, 1.0
    %v1728 = vadd.f32 %v1322, 1.0
    %v1729 = vadd.f32 %v1362, 1.0
    %v1730 = vadd.f32 %v1402, 1.0
    %v1731 = vadd.f32 %v1442, 1.0
    %v1732 = vadd.f32 %v1482, 1.0
    %v1733 = vadd.f32 %v1522, 1.0
    %v1734 = vadd.f32 %v1562, 1.0
    %v1735 = vadd.f32 %v1602, 1.0
    %v1736 = vadd.f32 %v1642, 1.0
    %v1737 = vadd.f32 %v1682, 1.0
    %v1738 = vadd.f32 %v1722, 1.0
    %v1739 = vmul.f32 %v1051, %v1723
    %v1740 = vmul.f32 %v1052, %v1724
    %v1741 = vmul.f32 %v1053, %v1725
    %v1742 = vmul.f32 %v1054, %v1726
    %v1743 = vmul.f32 %v1055, %v1727
    %v1744 = vmul.f32 %v1056, %v1728
    %v1745 = vmul.f32 %v1057, %v1729
    %v1746 = vmul.f32 %v1058, %v1730
    %v1747 = vmul.f32 %v1059, %v1731
    %v1748 = vmul.f32 %v1060, %v1732
    %v1749 = vmul.f32 %v1061, %v1733
    %v1750 = vmul.f32 %v1062, %v1734
    %v1751 = vmul.f32 %v1063, %v1735
    %v1752 = vmul.f32 %v1064, %v1736
    %v1753 = vmul.f32 %v1065, %v1737
    %v1754 = vmul.f32 %v1066, %v1738
    %v1755 = vpack.c.bf16 %v1747, %v1739
    %v1756 = vpack.c.bf16 %v1748, %v1740
    %v1757 = vpack.c.bf16 %v1749, %v1741
    %v1758 = vpack.c.bf16 %v1750, %v1742
    %v1759 = vpack.c.bf16 %v1751, %v1743
    %v1760 = vpack.c.bf16 %v1752, %v1744
    %v1761 = vpack.c.bf16 %v1753, %v1745
    %v1762 = vpack.c.bf16 %v1754, %v1746
    %v1763 = vld [vmem:[#allocation6] sm:$0xff]
    %v1764 = vld [vmem:[#allocation6 + $0x8] sm:$0xff]
    %v1765 = vld [vmem:[#allocation6 + $0x10] sm:$0xff]
    %v1766 = vld [vmem:[#allocation6 + $0x18] sm:$0xff]
    %v1767 = vld [vmem:[#allocation6 + $0x20] sm:$0xff]
    %v1768 = vld [vmem:[#allocation6 + $0x28] sm:$0xff]
    %v1769 = vld [vmem:[#allocation6 + $0x30] sm:$0xff]
    %v1770 = vld [vmem:[#allocation6 + $0x38] sm:$0xff]
    %v1771 = vld [vmem:[#allocation6 + $0x40] sm:$0xff]
    %v1772 = vld [vmem:[#allocation6 + $0x48] sm:$0xff]
    %v1773 = vld [vmem:[#allocation6 + $0x50] sm:$0xff]
    %v1774 = vld [vmem:[#allocation6 + $0x58] sm:$0xff]
    %v1775 = vld [vmem:[#allocation6 + $0x60] sm:$0xff]
    %v1776 = vld [vmem:[#allocation6 + $0x68] sm:$0xff]
    %v1777 = vld [vmem:[#allocation6 + $0x70] sm:$0xff]
    %v1778 = vld [vmem:[#allocation6 + $0x78] sm:$0xff]
    %v1779 = vld [vmem:[#allocation6 + $0x80] sm:$0xff]
    %v1780 = vld [vmem:[#allocation6 + $0x88] sm:$0xff]
    %v1781 = vld [vmem:[#allocation6 + $0x90] sm:$0xff]
    %v1782 = vld [vmem:[#allocation6 + $0x98] sm:$0xff]
    %v1783 = vld [vmem:[#allocation6 + $0xa0] sm:$0xff]
    %v1784 = vld [vmem:[#allocation6 + $0xa8] sm:$0xff]
    %v1785 = vld [vmem:[#allocation6 + $0xb0] sm:$0xff]
    %v1786 = vld [vmem:[#allocation6 + $0xb8] sm:$0xff]
    %v1787 = vld [vmem:[#allocation6 + $0xc0] sm:$0xff]
    %v1788 = vld [vmem:[#allocation6 + $0xc8] sm:$0xff]
    %v1789 = vld [vmem:[#allocation6 + $0xd0] sm:$0xff]
    %v1790 = vld [vmem:[#allocation6 + $0xd8] sm:$0xff]
    %v1791 = vld [vmem:[#allocation6 + $0xe0] sm:$0xff]
    %v1792 = vld [vmem:[#allocation6 + $0xe8] sm:$0xff]
    %v1793 = vld [vmem:[#allocation6 + $0xf0] sm:$0xff]
    %v1794 = vld [vmem:[#allocation6 + $0xf8] sm:$0xff]
    %v1795 = vld [vmem:[#allocation6 + $0x100] sm:$0xff]
    %v1796 = vld [vmem:[#allocation6 + $0x108] sm:$0xff]
    %v1797 = vld [vmem:[#allocation6 + $0x110] sm:$0xff]
    %v1798 = vld [vmem:[#allocation6 + $0x118] sm:$0xff]
    %v1799 = vld [vmem:[#allocation6 + $0x120] sm:$0xff]
    %v1800 = vld [vmem:[#allocation6 + $0x128] sm:$0xff]
    %v1801 = vld [vmem:[#allocation6 + $0x130] sm:$0xff]
    %v1802 = vld [vmem:[#allocation6 + $0x138] sm:$0xff]
    %v1803 = vld [vmem:[#allocation6 + $0x140] sm:$0xff]
    %v1804 = vld [vmem:[#allocation6 + $0x148] sm:$0xff]
    %v1805 = vld [vmem:[#allocation6 + $0x150] sm:$0xff]
    %v1806 = vld [vmem:[#allocation6 + $0x158] sm:$0xff]
    %v1807 = vld [vmem:[#allocation6 + $0x160] sm:$0xff]
    %v1808 = vld [vmem:[#allocation6 + $0x168] sm:$0xff]
    %v1809 = vld [vmem:[#allocation6 + $0x170] sm:$0xff]
    %v1810 = vld [vmem:[#allocation6 + $0x178] sm:$0xff]
    %v1811 = vld [vmem:[#allocation6 + $0x180] sm:$0xff]
    %v1812 = vld [vmem:[#allocation6 + $0x188] sm:$0xff]
    %v1813 = vld [vmem:[#allocation6 + $0x190] sm:$0xff]
    %v1814 = vld [vmem:[#allocation6 + $0x198] sm:$0xff]
    %v1815 = vld [vmem:[#allocation6 + $0x1a0] sm:$0xff]
    %v1816 = vld [vmem:[#allocation6 + $0x1a8] sm:$0xff]
    %v1817 = vld [vmem:[#allocation6 + $0x1b0] sm:$0xff]
    %v1818 = vld [vmem:[#allocation6 + $0x1b8] sm:$0xff]
    %v1819 = vld [vmem:[#allocation6 + $0x1c0] sm:$0xff]
    %v1820 = vld [vmem:[#allocation6 + $0x1c8] sm:$0xff]
    %v1821 = vld [vmem:[#allocation6 + $0x1d0] sm:$0xff]
    %v1822 = vld [vmem:[#allocation6 + $0x1d8] sm:$0xff]
    %v1823 = vld [vmem:[#allocation6 + $0x1e0] sm:$0xff]
    %v1824 = vld [vmem:[#allocation6 + $0x1e8] sm:$0xff]
    %v1825 = vld [vmem:[#allocation6 + $0x1f0] sm:$0xff]
    %v1826 = vld [vmem:[#allocation6 + $0x1f8] sm:$0xff]
    %v1827 = vld [vmem:[#allocation6 + $0x200] sm:$0xff]
    %v1828 = vld [vmem:[#allocation6 + $0x208] sm:$0xff]
    %v1829 = vld [vmem:[#allocation6 + $0x210] sm:$0xff]
    %v1830 = vld [vmem:[#allocation6 + $0x218] sm:$0xff]
    %v1831 = vld [vmem:[#allocation6 + $0x220] sm:$0xff]
    %v1832 = vld [vmem:[#allocation6 + $0x228] sm:$0xff]
    %v1833 = vld [vmem:[#allocation6 + $0x230] sm:$0xff]
    %v1834 = vld [vmem:[#allocation6 + $0x238] sm:$0xff]
    %v1835 = vld [vmem:[#allocation6 + $0x240] sm:$0xff]
    %v1836 = vld [vmem:[#allocation6 + $0x248] sm:$0xff]
    %v1837 = vld [vmem:[#allocation6 + $0x250] sm:$0xff]
    %v1838 = vld [vmem:[#allocation6 + $0x258] sm:$0xff]
    %v1839 = vld [vmem:[#allocation6 + $0x260] sm:$0xff]
    %v1840 = vld [vmem:[#allocation6 + $0x268] sm:$0xff]
    %v1841 = vld [vmem:[#allocation6 + $0x270] sm:$0xff]
    %v1842 = vld [vmem:[#allocation6 + $0x278] sm:$0xff]
    %v1843 = vld [vmem:[#allocation6 + $0x280] sm:$0xff]
    %v1844 = vld [vmem:[#allocation6 + $0x288] sm:$0xff]
    %v1845 = vld [vmem:[#allocation6 + $0x290] sm:$0xff]
    %v1846 = vld [vmem:[#allocation6 + $0x298] sm:$0xff]
    %v1847 = vld [vmem:[#allocation6 + $0x2a0] sm:$0xff]
    %v1848 = vld [vmem:[#allocation6 + $0x2a8] sm:$0xff]
    %v1849 = vld [vmem:[#allocation6 + $0x2b0] sm:$0xff]
    %v1850 = vld [vmem:[#allocation6 + $0x2b8] sm:$0xff]
    %v1851 = vld [vmem:[#allocation6 + $0x2c0] sm:$0xff]
    %v1852 = vld [vmem:[#allocation6 + $0x2c8] sm:$0xff]
    %v1853 = vld [vmem:[#allocation6 + $0x2d0] sm:$0xff]
    %v1854 = vld [vmem:[#allocation6 + $0x2d8] sm:$0xff]
    %v1855 = vld [vmem:[#allocation6 + $0x2e0] sm:$0xff]
    %v1856 = vld [vmem:[#allocation6 + $0x2e8] sm:$0xff]
    %v1857 = vld [vmem:[#allocation6 + $0x2f0] sm:$0xff]
    %v1858 = vld [vmem:[#allocation6 + $0x2f8] sm:$0xff]
    %v1859 = vld [vmem:[#allocation6 + $0x300] sm:$0xff]
    %v1860 = vld [vmem:[#allocation6 + $0x308] sm:$0xff]
    %v1861 = vld [vmem:[#allocation6 + $0x310] sm:$0xff]
    %v1862 = vld [vmem:[#allocation6 + $0x318] sm:$0xff]
    %v1863 = vld [vmem:[#allocation6 + $0x320] sm:$0xff]
    %v1864 = vld [vmem:[#allocation6 + $0x328] sm:$0xff]
    %v1865 = vld [vmem:[#allocation6 + $0x330] sm:$0xff]
    %v1866 = vld [vmem:[#allocation6 + $0x338] sm:$0xff]
    %v1867 = vld [vmem:[#allocation6 + $0x340] sm:$0xff]
    %v1868 = vld [vmem:[#allocation6 + $0x348] sm:$0xff]
    %v1869 = vld [vmem:[#allocation6 + $0x350] sm:$0xff]
    %v1870 = vld [vmem:[#allocation6 + $0x358] sm:$0xff]
    %v1871 = vld [vmem:[#allocation6 + $0x360] sm:$0xff]
    %v1872 = vld [vmem:[#allocation6 + $0x368] sm:$0xff]
    %v1873 = vld [vmem:[#allocation6 + $0x370] sm:$0xff]
    %v1874 = vld [vmem:[#allocation6 + $0x378] sm:$0xff]
    %v1875 = vld [vmem:[#allocation6 + $0x380] sm:$0xff]
    %v1876 = vld [vmem:[#allocation6 + $0x388] sm:$0xff]
    %v1877 = vld [vmem:[#allocation6 + $0x390] sm:$0xff]
    %v1878 = vld [vmem:[#allocation6 + $0x398] sm:$0xff]
    %v1879 = vld [vmem:[#allocation6 + $0x3a0] sm:$0xff]
    %v1880 = vld [vmem:[#allocation6 + $0x3a8] sm:$0xff]
    %v1881 = vld [vmem:[#allocation6 + $0x3b0] sm:$0xff]
    %v1882 = vld [vmem:[#allocation6 + $0x3b8] sm:$0xff]
    %v1883 = vld [vmem:[#allocation6 + $0x3c0] sm:$0xff]
    %v1884 = vld [vmem:[#allocation6 + $0x3c8] sm:$0xff]
    %v1885 = vld [vmem:[#allocation6 + $0x3d0] sm:$0xff]
    %v1886 = vld [vmem:[#allocation6 + $0x3d8] sm:$0xff]
    %v1887 = vld [vmem:[#allocation6 + $0x3e0] sm:$0xff]
    %v1888 = vld [vmem:[#allocation6 + $0x3e8] sm:$0xff]
    %v1889 = vld [vmem:[#allocation6 + $0x3f0] sm:$0xff]
    %v1890 = vld [vmem:[#allocation6 + $0x3f8] sm:$0xff]
    %v2019 = vunpack.c.l.b16 %v1763
    %v2020 = vunpack.c.h.b16 %v1763
    %v2021 = vunpack.c.l.b16 %v1764
    %v2022 = vunpack.c.h.b16 %v1764
    %v2023 = vunpack.c.l.b16 %v1765
    %v2024 = vunpack.c.h.b16 %v1765
    %v2025 = vunpack.c.l.b16 %v1766
    %v2026 = vunpack.c.h.b16 %v1766
    %v2027 = vunpack.c.l.b16 %v1767
    %v2028 = vunpack.c.h.b16 %v1767
    %v2029 = vunpack.c.l.b16 %v1768
    %v2030 = vunpack.c.h.b16 %v1768
    %v2031 = vunpack.c.l.b16 %v1769
    %v2032 = vunpack.c.h.b16 %v1769
    %v2033 = vunpack.c.l.b16 %v1770
    %v2034 = vunpack.c.h.b16 %v1770
    %v2035 = vunpack.c.l.b16 %v1771
    %v2036 = vunpack.c.h.b16 %v1771
    %v2037 = vunpack.c.l.b16 %v1772
    %v2038 = vunpack.c.h.b16 %v1772
    %v2039 = vunpack.c.l.b16 %v1773
    %v2040 = vunpack.c.h.b16 %v1773
    %v2041 = vunpack.c.l.b16 %v1774
    %v2042 = vunpack.c.h.b16 %v1774
    %v2043 = vunpack.c.l.b16 %v1775
    %v2044 = vunpack.c.h.b16 %v1775
    %v2045 = vunpack.c.l.b16 %v1776
    %v2046 = vunpack.c.h.b16 %v1776
    %v2047 = vunpack.c.l.b16 %v1777
    %v2048 = vunpack.c.h.b16 %v1777
    %v2049 = vunpack.c.l.b16 %v1778
    %v2050 = vunpack.c.h.b16 %v1778
    %v2051 = vunpack.c.l.b16 %v1779
    %v2052 = vunpack.c.h.b16 %v1779
    %v2053 = vunpack.c.l.b16 %v1780
    %v2054 = vunpack.c.h.b16 %v1780
    %v2055 = vunpack.c.l.b16 %v1781
    %v2056 = vunpack.c.h.b16 %v1781
    %v2057 = vunpack.c.l.b16 %v1782
    %v2058 = vunpack.c.h.b16 %v1782
    %v2059 = vunpack.c.l.b16 %v1783
    %v2060 = vunpack.c.h.b16 %v1783
    %v2061 = vunpack.c.l.b16 %v1784
    %v2062 = vunpack.c.h.b16 %v1784
    %v2063 = vunpack.c.l.b16 %v1785
    %v2064 = vunpack.c.h.b16 %v1785
    %v2065 = vunpack.c.l.b16 %v1786
    %v2066 = vunpack.c.h.b16 %v1786
    %v2067 = vunpack.c.l.b16 %v1787
    %v2068 = vunpack.c.h.b16 %v1787
    %v2069 = vunpack.c.l.b16 %v1788
    %v2070 = vunpack.c.h.b16 %v1788
    %v2071 = vunpack.c.l.b16 %v1789
    %v2072 = vunpack.c.h.b16 %v1789
    %v2073 = vunpack.c.l.b16 %v1790
    %v2074 = vunpack.c.h.b16 %v1790
    %v2075 = vunpack.c.l.b16 %v1791
    %v2076 = vunpack.c.h.b16 %v1791
    %v2077 = vunpack.c.l.b16 %v1792
    %v2078 = vunpack.c.h.b16 %v1792
    %v2079 = vunpack.c.l.b16 %v1793
    %v2080 = vunpack.c.h.b16 %v1793
    %v2081 = vunpack.c.l.b16 %v1794
    %v2082 = vunpack.c.h.b16 %v1794
    %v2083 = vunpack.c.l.b16 %v1795
    %v2084 = vunpack.c.h.b16 %v1795
    %v2085 = vunpack.c.l.b16 %v1796
    %v2086 = vunpack.c.h.b16 %v1796
    %v2087 = vunpack.c.l.b16 %v1797
    %v2088 = vunpack.c.h.b16 %v1797
    %v2089 = vunpack.c.l.b16 %v1798
    %v2090 = vunpack.c.h.b16 %v1798
    %v2091 = vunpack.c.l.b16 %v1799
    %v2092 = vunpack.c.h.b16 %v1799
    %v2093 = vunpack.c.l.b16 %v1800
    %v2094 = vunpack.c.h.b16 %v1800
    %v2095 = vunpack.c.l.b16 %v1801
    %v2096 = vunpack.c.h.b16 %v1801
    %v2097 = vunpack.c.l.b16 %v1802
    %v2098 = vunpack.c.h.b16 %v1802
    %v2099 = vunpack.c.l.b16 %v1803
    %v2100 = vunpack.c.h.b16 %v1803
    %v2101 = vunpack.c.l.b16 %v1804
    %v2102 = vunpack.c.h.b16 %v1804
    %v2103 = vunpack.c.l.b16 %v1805
    %v2104 = vunpack.c.h.b16 %v1805
    %v2105 = vunpack.c.l.b16 %v1806
    %v2106 = vunpack.c.h.b16 %v1806
    %v2107 = vunpack.c.l.b16 %v1807
    %v2108 = vunpack.c.h.b16 %v1807
    %v2109 = vunpack.c.l.b16 %v1808
    %v2110 = vunpack.c.h.b16 %v1808
    %v2111 = vunpack.c.l.b16 %v1809
    %v2112 = vunpack.c.h.b16 %v1809
    %v2113 = vunpack.c.l.b16 %v1810
    %v2114 = vunpack.c.h.b16 %v1810
    %v2115 = vunpack.c.l.b16 %v1811
    %v2116 = vunpack.c.h.b16 %v1811
    %v2117 = vunpack.c.l.b16 %v1812
    %v2118 = vunpack.c.h.b16 %v1812
    %v2119 = vunpack.c.l.b16 %v1813
    %v2120 = vunpack.c.h.b16 %v1813
    %v2121 = vunpack.c.l.b16 %v1814
    %v2122 = vunpack.c.h.b16 %v1814
    %v2123 = vunpack.c.l.b16 %v1815
    %v2124 = vunpack.c.h.b16 %v1815
    %v2125 = vunpack.c.l.b16 %v1816
    %v2126 = vunpack.c.h.b16 %v1816
    %v2127 = vunpack.c.l.b16 %v1817
    %v2128 = vunpack.c.h.b16 %v1817
    %v2129 = vunpack.c.l.b16 %v1818
    %v2130 = vunpack.c.h.b16 %v1818
    %v2131 = vunpack.c.l.b16 %v1819
    %v2132 = vunpack.c.h.b16 %v1819
    %v2133 = vunpack.c.l.b16 %v1820
    %v2134 = vunpack.c.h.b16 %v1820
    %v2135 = vunpack.c.l.b16 %v1821
    %v2136 = vunpack.c.h.b16 %v1821
    %v2137 = vunpack.c.l.b16 %v1822
    %v2138 = vunpack.c.h.b16 %v1822
    %v2139 = vunpack.c.l.b16 %v1823
    %v2140 = vunpack.c.h.b16 %v1823
    %v2141 = vunpack.c.l.b16 %v1824
    %v2142 = vunpack.c.h.b16 %v1824
    %v2143 = vunpack.c.l.b16 %v1825
    %v2144 = vunpack.c.h.b16 %v1825
    %v2145 = vunpack.c.l.b16 %v1826
    %v2146 = vunpack.c.h.b16 %v1826
    %v2147 = vunpack.c.l.b16 %v1827
    %v2148 = vunpack.c.h.b16 %v1827
    %v2149 = vunpack.c.l.b16 %v1828
    %v2150 = vunpack.c.h.b16 %v1828
    %v2151 = vunpack.c.l.b16 %v1829
    %v2152 = vunpack.c.h.b16 %v1829
    %v2153 = vunpack.c.l.b16 %v1830
    %v2154 = vunpack.c.h.b16 %v1830
    %v2155 = vunpack.c.l.b16 %v1831
    %v2156 = vunpack.c.h.b16 %v1831
    %v2157 = vunpack.c.l.b16 %v1832
    %v2158 = vunpack.c.h.b16 %v1832
    %v2159 = vunpack.c.l.b16 %v1833
    %v2160 = vunpack.c.h.b16 %v1833
    %v2161 = vunpack.c.l.b16 %v1834
    %v2162 = vunpack.c.h.b16 %v1834
    %v2163 = vunpack.c.l.b16 %v1835
    %v2164 = vunpack.c.h.b16 %v1835
    %v2165 = vunpack.c.l.b16 %v1836
    %v2166 = vunpack.c.h.b16 %v1836
    %v2167 = vunpack.c.l.b16 %v1837
    %v2168 = vunpack.c.h.b16 %v1837
    %v2169 = vunpack.c.l.b16 %v1838
    %v2170 = vunpack.c.h.b16 %v1838
    %v2171 = vunpack.c.l.b16 %v1839
    %v2172 = vunpack.c.h.b16 %v1839
    %v2173 = vunpack.c.l.b16 %v1840
    %v2174 = vunpack.c.h.b16 %v1840
    %v2175 = vunpack.c.l.b16 %v1841
    %v2176 = vunpack.c.h.b16 %v1841
    %v2177 = vunpack.c.l.b16 %v1842
    %v2178 = vunpack.c.h.b16 %v1842
    %v2179 = vunpack.c.l.b16 %v1843
    %v2180 = vunpack.c.h.b16 %v1843
    %v2181 = vunpack.c.l.b16 %v1844
    %v2182 = vunpack.c.h.b16 %v1844
    %v2183 = vunpack.c.l.b16 %v1845
    %v2184 = vunpack.c.h.b16 %v1845
    %v2185 = vunpack.c.l.b16 %v1846
    %v2186 = vunpack.c.h.b16 %v1846
    %v2187 = vunpack.c.l.b16 %v1847
    %v2188 = vunpack.c.h.b16 %v1847
    %v2189 = vunpack.c.l.b16 %v1848
    %v2190 = vunpack.c.h.b16 %v1848
    %v2191 = vunpack.c.l.b16 %v1849
    %v2192 = vunpack.c.h.b16 %v1849
    %v2193 = vunpack.c.l.b16 %v1850
    %v2194 = vunpack.c.h.b16 %v1850
    %v2195 = vunpack.c.l.b16 %v1851
    %v2196 = vunpack.c.h.b16 %v1851
    %v2197 = vunpack.c.l.b16 %v1852
    %v2198 = vunpack.c.h.b16 %v1852
    %v2199 = vunpack.c.l.b16 %v1853
    %v2200 = vunpack.c.h.b16 %v1853
    %v2201 = vunpack.c.l.b16 %v1854
    %v2202 = vunpack.c.h.b16 %v1854
    %v2203 = vunpack.c.l.b16 %v1855
    %v2204 = vunpack.c.h.b16 %v1855
    %v2205 = vunpack.c.l.b16 %v1856
    %v2206 = vunpack.c.h.b16 %v1856
    %v2207 = vunpack.c.l.b16 %v1857
    %v2208 = vunpack.c.h.b16 %v1857
    %v2209 = vunpack.c.l.b16 %v1858
    %v2210 = vunpack.c.h.b16 %v1858
    %v2211 = vunpack.c.l.b16 %v1859
    %v2212 = vunpack.c.h.b16 %v1859
    %v2213 = vunpack.c.l.b16 %v1860
    %v2214 = vunpack.c.h.b16 %v1860
    %v2215 = vunpack.c.l.b16 %v1861
    %v2216 = vunpack.c.h.b16 %v1861
    %v2217 = vunpack.c.l.b16 %v1862
    %v2218 = vunpack.c.h.b16 %v1862
    %v2219 = vunpack.c.l.b16 %v1863
    %v2220 = vunpack.c.h.b16 %v1863
    %v2221 = vunpack.c.l.b16 %v1864
    %v2222 = vunpack.c.h.b16 %v1864
    %v2223 = vunpack.c.l.b16 %v1865
    %v2224 = vunpack.c.h.b16 %v1865
    %v2225 = vunpack.c.l.b16 %v1866
    %v2226 = vunpack.c.h.b16 %v1866
    %v2227 = vunpack.c.l.b16 %v1867
    %v2228 = vunpack.c.h.b16 %v1867
    %v2229 = vunpack.c.l.b16 %v1868
    %v2230 = vunpack.c.h.b16 %v1868
    %v2231 = vunpack.c.l.b16 %v1869
    %v2232 = vunpack.c.h.b16 %v1869
    %v2233 = vunpack.c.l.b16 %v1870
    %v2234 = vunpack.c.h.b16 %v1870
    %v2235 = vunpack.c.l.b16 %v1871
    %v2236 = vunpack.c.h.b16 %v1871
    %v2237 = vunpack.c.l.b16 %v1872
    %v2238 = vunpack.c.h.b16 %v1872
    %v2239 = vunpack.c.l.b16 %v1873
    %v2240 = vunpack.c.h.b16 %v1873
    %v2241 = vunpack.c.l.b16 %v1874
    %v2242 = vunpack.c.h.b16 %v1874
    %v2243 = vunpack.c.l.b16 %v1875
    %v2244 = vunpack.c.h.b16 %v1875
    %v2245 = vunpack.c.l.b16 %v1876
    %v2246 = vunpack.c.h.b16 %v1876
    %v2247 = vunpack.c.l.b16 %v1877
    %v2248 = vunpack.c.h.b16 %v1877
    %v2249 = vunpack.c.l.b16 %v1878
    %v2250 = vunpack.c.h.b16 %v1878
    %v2251 = vunpack.c.l.b16 %v1879
    %v2252 = vunpack.c.h.b16 %v1879
    %v2253 = vunpack.c.l.b16 %v1880
    %v2254 = vunpack.c.h.b16 %v1880
    %v2255 = vunpack.c.l.b16 %v1881
    %v2256 = vunpack.c.h.b16 %v1881
    %v2257 = vunpack.c.l.b16 %v1882
    %v2258 = vunpack.c.h.b16 %v1882
    %v2259 = vunpack.c.l.b16 %v1883
    %v2260 = vunpack.c.h.b16 %v1883
    %v2261 = vunpack.c.l.b16 %v1884
    %v2262 = vunpack.c.h.b16 %v1884
    %v2263 = vunpack.c.l.b16 %v1885
    %v2264 = vunpack.c.h.b16 %v1885
    %v2265 = vunpack.c.l.b16 %v1886
    %v2266 = vunpack.c.h.b16 %v1886
    %v2267 = vunpack.c.l.b16 %v1887
    %v2268 = vunpack.c.h.b16 %v1887
    %v2269 = vunpack.c.l.b16 %v1888
    %v2270 = vunpack.c.h.b16 %v1888
    %v2271 = vunpack.c.l.b16 %v1889
    %v2272 = vunpack.c.h.b16 %v1889
    %v2273 = vunpack.c.l.b16 %v1890
    %v2274 = vunpack.c.h.b16 %v1890
    %v2275 = vpack.c.b16 %v2021, %v2019
    %v2276 = vpack.c.b16 %v2022, %v2020
    %v2277 = vpack.c.b16 %v2025, %v2023
    %v2278 = vpack.c.b16 %v2026, %v2024
    %v2279 = vpack.c.b16 %v2029, %v2027
    %v2280 = vpack.c.b16 %v2030, %v2028
    %v2281 = vpack.c.b16 %v2033, %v2031
    %v2282 = vpack.c.b16 %v2034, %v2032
    %v2283 = vpack.c.b16 %v2037, %v2035
    %v2284 = vpack.c.b16 %v2038, %v2036
    %v2285 = vpack.c.b16 %v2041, %v2039
    %v2286 = vpack.c.b16 %v2042, %v2040
    %v2287 = vpack.c.b16 %v2045, %v2043
    %v2288 = vpack.c.b16 %v2046, %v2044
    %v2289 = vpack.c.b16 %v2049, %v2047
    %v2290 = vpack.c.b16 %v2050, %v2048
    %v2291 = vpack.c.b16 %v2053, %v2051
    %v2292 = vpack.c.b16 %v2054, %v2052
    %v2293 = vpack.c.b16 %v2057, %v2055
    %v2294 = vpack.c.b16 %v2058, %v2056
    %v2295 = vpack.c.b16 %v2061, %v2059
    %v2296 = vpack.c.b16 %v2062, %v2060
    %v2297 = vpack.c.b16 %v2065, %v2063
    %v2298 = vpack.c.b16 %v2066, %v2064
    %v2299 = vpack.c.b16 %v2069, %v2067
    %v2300 = vpack.c.b16 %v2070, %v2068
    %v2301 = vpack.c.b16 %v2073, %v2071
    %v2302 = vpack.c.b16 %v2074, %v2072
    %v2303 = vpack.c.b16 %v2077, %v2075
    %v2304 = vpack.c.b16 %v2078, %v2076
    %v2305 = vpack.c.b16 %v2081, %v2079
    %v2306 = vpack.c.b16 %v2082, %v2080
    %v2307 = vpack.c.b16 %v2085, %v2083
    %v2308 = vpack.c.b16 %v2086, %v2084
    %v2309 = vpack.c.b16 %v2089, %v2087
    %v2310 = vpack.c.b16 %v2090, %v2088
    %v2311 = vpack.c.b16 %v2093, %v2091
    %v2312 = vpack.c.b16 %v2094, %v2092
    %v2313 = vpack.c.b16 %v2097, %v2095
    %v2314 = vpack.c.b16 %v2098, %v2096
    %v2315 = vpack.c.b16 %v2101, %v2099
    %v2316 = vpack.c.b16 %v2102, %v2100
    %v2317 = vpack.c.b16 %v2105, %v2103
    %v2318 = vpack.c.b16 %v2106, %v2104
    %v2319 = vpack.c.b16 %v2109, %v2107
    %v2320 = vpack.c.b16 %v2110, %v2108
    %v2321 = vpack.c.b16 %v2113, %v2111
    %v2322 = vpack.c.b16 %v2114, %v2112
    %v2323 = vpack.c.b16 %v2117, %v2115
    %v2324 = vpack.c.b16 %v2118, %v2116
    %v2325 = vpack.c.b16 %v2121, %v2119
    %v2326 = vpack.c.b16 %v2122, %v2120
    %v2327 = vpack.c.b16 %v2125, %v2123
    %v2328 = vpack.c.b16 %v2126, %v2124
    %v2329 = vpack.c.b16 %v2129, %v2127
    %v2330 = vpack.c.b16 %v2130, %v2128
    %v2331 = vpack.c.b16 %v2133, %v2131
    %v2332 = vpack.c.b16 %v2134, %v2132
    %v2333 = vpack.c.b16 %v2137, %v2135
    %v2334 = vpack.c.b16 %v2138, %v2136
    %v2335 = vpack.c.b16 %v2141, %v2139
    %v2336 = vpack.c.b16 %v2142, %v2140
    %v2337 = vpack.c.b16 %v2145, %v2143
    %v2338 = vpack.c.b16 %v2146, %v2144
    %v2339 = vpack.c.b16 %v2149, %v2147
    %v2340 = vpack.c.b16 %v2150, %v2148
    %v2341 = vpack.c.b16 %v2153, %v2151
    %v2342 = vpack.c.b16 %v2154, %v2152
    %v2343 = vpack.c.b16 %v2157, %v2155
    %v2344 = vpack.c.b16 %v2158, %v2156
    %v2345 = vpack.c.b16 %v2161, %v2159
    %v2346 = vpack.c.b16 %v2162, %v2160
    %v2347 = vpack.c.b16 %v2165, %v2163
    %v2348 = vpack.c.b16 %v2166, %v2164
    %v2349 = vpack.c.b16 %v2169, %v2167
    %v2350 = vpack.c.b16 %v2170, %v2168
    %v2351 = vpack.c.b16 %v2173, %v2171
    %v2352 = vpack.c.b16 %v2174, %v2172
    %v2353 = vpack.c.b16 %v2177, %v2175
    %v2354 = vpack.c.b16 %v2178, %v2176
    %v2355 = vpack.c.b16 %v2181, %v2179
    %v2356 = vpack.c.b16 %v2182, %v2180
    %v2357 = vpack.c.b16 %v2185, %v2183
    %v2358 = vpack.c.b16 %v2186, %v2184
    %v2359 = vpack.c.b16 %v2189, %v2187
    %v2360 = vpack.c.b16 %v2190, %v2188
    %v2361 = vpack.c.b16 %v2193, %v2191
    %v2362 = vpack.c.b16 %v2194, %v2192
    %v2363 = vpack.c.b16 %v2197, %v2195
    %v2364 = vpack.c.b16 %v2198, %v2196
    %v2365 = vpack.c.b16 %v2201, %v2199
    %v2366 = vpack.c.b16 %v2202, %v2200
    %v2367 = vpack.c.b16 %v2205, %v2203
    %v2368 = vpack.c.b16 %v2206, %v2204
    %v2369 = vpack.c.b16 %v2209, %v2207
    %v2370 = vpack.c.b16 %v2210, %v2208
    %v2371 = vpack.c.b16 %v2213, %v2211
    %v2372 = vpack.c.b16 %v2214, %v2212
    %v2373 = vpack.c.b16 %v2217, %v2215
    %v2374 = vpack.c.b16 %v2218, %v2216
    %v2375 = vpack.c.b16 %v2221, %v2219
    %v2376 = vpack.c.b16 %v2222, %v2220
    %v2377 = vpack.c.b16 %v2225, %v2223
    %v2378 = vpack.c.b16 %v2226, %v2224
    %v2379 = vpack.c.b16 %v2229, %v2227
    %v2380 = vpack.c.b16 %v2230, %v2228
    %v2381 = vpack.c.b16 %v2233, %v2231
    %v2382 = vpack.c.b16 %v2234, %v2232
    %v2383 = vpack.c.b16 %v2237, %v2235
    %v2384 = vpack.c.b16 %v2238, %v2236
    %v2385 = vpack.c.b16 %v2241, %v2239
    %v2386 = vpack.c.b16 %v2242, %v2240
    %v2387 = vpack.c.b16 %v2245, %v2243
    %v2388 = vpack.c.b16 %v2246, %v2244
    %v2389 = vpack.c.b16 %v2249, %v2247
    %v2390 = vpack.c.b16 %v2250, %v2248
    %v2391 = vpack.c.b16 %v2253, %v2251
    %v2392 = vpack.c.b16 %v2254, %v2252
    %v2393 = vpack.c.b16 %v2257, %v2255
    %v2394 = vpack.c.b16 %v2258, %v2256
    %v2395 = vpack.c.b16 %v2261, %v2259
    %v2396 = vpack.c.b16 %v2262, %v2260
    %v2397 = vpack.c.b16 %v2265, %v2263
    %v2398 = vpack.c.b16 %v2266, %v2264
    %v2399 = vpack.c.b16 %v2269, %v2267
    %v2400 = vpack.c.b16 %v2270, %v2268
    %v2401 = vpack.c.b16 %v2273, %v2271
    %v2402 = vpack.c.b16 %v2274, %v2272
    %2531 = vmatpush.bf16.msra.mxu0 %v2289
    %2532 = vmatpush.bf16.msra.mxu0 %v2287
    %2533 = vmatpush.bf16.msra.mxu0 %v2285
    %2534 = vmatpush.bf16.msra.mxu0 %v2283
    %2535 = vmatpush.bf16.msra.mxu0 %v2281
    %2536 = vmatpush.bf16.msra.mxu0 %v2279
    %2537 = vmatpush.bf16.msra.mxu0 %v2277
    %2538 = vmatpush.bf16.msra.mxu0 %v2275
    %2539 = vmatmul.bf16.gmra.mxu0 %v1755
    %v2540 = vpop.f32.mrf.mxu0
    %v2541 = vadd.f32 0.0, %v2540
    %v2542 = vpop.f32.mrf.mxu0
    %v2543 = vadd.f32 0.0, %v2542
    %2544 = vdwg.mxu0
    %2545 = vmatpush.bf16.msra.mxu0 %v2305
    %2546 = vmatpush.bf16.msra.mxu0 %v2303
    %2547 = vmatpush.bf16.msra.mxu0 %v2301
    %2548 = vmatpush.bf16.msra.mxu0 %v2299
    %2549 = vmatpush.bf16.msra.mxu0 %v2297
    %2550 = vmatpush.bf16.msra.mxu0 %v2295
    %2551 = vmatpush.bf16.msra.mxu0 %v2293
    %2552 = vmatpush.bf16.msra.mxu0 %v2291
    %2553 = vmatmul.bf16.gmra.mxu0 %v1756
    %v2554 = vpop.f32.mrf.mxu0
    %v2555 = vadd.f32 %v2541, %v2554
    %v2556 = vpop.f32.mrf.mxu0
    %v2557 = vadd.f32 %v2543, %v2556
    %2558 = vdwg.mxu0
    %2559 = vmatpush.bf16.msra.mxu0 %v2321
    %2560 = vmatpush.bf16.msra.mxu0 %v2319
    %2561 = vmatpush.bf16.msra.mxu0 %v2317
    %2562 = vmatpush.bf16.msra.mxu0 %v2315
    %2563 = vmatpush.bf16.msra.mxu0 %v2313
    %2564 = vmatpush.bf16.msra.mxu0 %v2311
    %2565 = vmatpush.bf16.msra.mxu0 %v2309
    %2566 = vmatpush.bf16.msra.mxu0 %v2307
    %2567 = vmatmul.bf16.gmra.mxu0 %v1757
    %v2568 = vpop.f32.mrf.mxu0
    %v2569 = vadd.f32 %v2555, %v2568
    %v2570 = vpop.f32.mrf.mxu0
    %v2571 = vadd.f32 %v2557, %v2570
    %2572 = vdwg.mxu0
    %2573 = vmatpush.bf16.msra.mxu0 %v2337
    %2574 = vmatpush.bf16.msra.mxu0 %v2335
    %2575 = vmatpush.bf16.msra.mxu0 %v2333
    %2576 = vmatpush.bf16.msra.mxu0 %v2331
    %2577 = vmatpush.bf16.msra.mxu0 %v2329
    %2578 = vmatpush.bf16.msra.mxu0 %v2327
    %2579 = vmatpush.bf16.msra.mxu0 %v2325
    %2580 = vmatpush.bf16.msra.mxu0 %v2323
    %2581 = vmatmul.bf16.gmra.mxu0 %v1758
    %v2582 = vpop.f32.mrf.mxu0
    %v2583 = vadd.f32 %v2569, %v2582
    %v2584 = vpop.f32.mrf.mxu0
    %v2585 = vadd.f32 %v2571, %v2584
    %2586 = vdwg.mxu0
    %2587 = vmatpush.bf16.msra.mxu0 %v2353
    %2588 = vmatpush.bf16.msra.mxu0 %v2351
    %2589 = vmatpush.bf16.msra.mxu0 %v2349
    %2590 = vmatpush.bf16.msra.mxu0 %v2347
    %2591 = vmatpush.bf16.msra.mxu0 %v2345
    %2592 = vmatpush.bf16.msra.mxu0 %v2343
    %2593 = vmatpush.bf16.msra.mxu0 %v2341
    %2594 = vmatpush.bf16.msra.mxu0 %v2339
    %2595 = vmatmul.bf16.gmra.mxu0 %v1759
    %v2596 = vpop.f32.mrf.mxu0
    %v2597 = vadd.f32 %v2583, %v2596
    %v2598 = vpop.f32.mrf.mxu0
    %v2599 = vadd.f32 %v2585, %v2598
    %2600 = vdwg.mxu0
    %2601 = vmatpush.bf16.msra.mxu0 %v2369
    %2602 = vmatpush.bf16.msra.mxu0 %v2367
    %2603 = vmatpush.bf16.msra.mxu0 %v2365
    %2604 = vmatpush.bf16.msra.mxu0 %v2363
    %2605 = vmatpush.bf16.msra.mxu0 %v2361
    %2606 = vmatpush.bf16.msra.mxu0 %v2359
    %2607 = vmatpush.bf16.msra.mxu0 %v2357
    %2608 = vmatpush.bf16.msra.mxu0 %v2355
    %2609 = vmatmul.bf16.gmra.mxu0 %v1760
    %v2610 = vpop.f32.mrf.mxu0
    %v2611 = vadd.f32 %v2597, %v2610
    %v2612 = vpop.f32.mrf.mxu0
    %v2613 = vadd.f32 %v2599, %v2612
    %2614 = vdwg.mxu0
    %2615 = vmatpush.bf16.msra.mxu0 %v2385
    %2616 = vmatpush.bf16.msra.mxu0 %v2383
    %2617 = vmatpush.bf16.msra.mxu0 %v2381
    %2618 = vmatpush.bf16.msra.mxu0 %v2379
    %2619 = vmatpush.bf16.msra.mxu0 %v2377
    %2620 = vmatpush.bf16.msra.mxu0 %v2375
    %2621 = vmatpush.bf16.msra.mxu0 %v2373
    %2622 = vmatpush.bf16.msra.mxu0 %v2371
    %2623 = vmatmul.bf16.gmra.mxu0 %v1761
    %v2624 = vpop.f32.mrf.mxu0
    %v2625 = vadd.f32 %v2611, %v2624
    %v2626 = vpop.f32.mrf.mxu0
    %v2627 = vadd.f32 %v2613, %v2626
    %2628 = vdwg.mxu0
    %2629 = vmatpush.bf16.msra.mxu0 %v2401
    %2630 = vmatpush.bf16.msra.mxu0 %v2399
    %2631 = vmatpush.bf16.msra.mxu0 %v2397
    %2632 = vmatpush.bf16.msra.mxu0 %v2395
    %2633 = vmatpush.bf16.msra.mxu0 %v2393
    %2634 = vmatpush.bf16.msra.mxu0 %v2391
    %2635 = vmatpush.bf16.msra.mxu0 %v2389
    %2636 = vmatpush.bf16.msra.mxu0 %v2387
    %2637 = vmatmul.bf16.gmra.mxu0 %v1762
    %v2638 = vpop.f32.mrf.mxu0
    %v2639 = vadd.f32 %v2625, %v2638
    %v2640 = vpop.f32.mrf.mxu0
    %v2641 = vadd.f32 %v2627, %v2640
    %2642 = vdwg.mxu0
    %2643 = vmatpush.bf16.msra.mxu0 %v2290
    %2644 = vmatpush.bf16.msra.mxu0 %v2288
    %2645 = vmatpush.bf16.msra.mxu0 %v2286
    %2646 = vmatpush.bf16.msra.mxu0 %v2284
    %2647 = vmatpush.bf16.msra.mxu0 %v2282
    %2648 = vmatpush.bf16.msra.mxu0 %v2280
    %2649 = vmatpush.bf16.msra.mxu0 %v2278
    %2650 = vmatpush.bf16.msra.mxu0 %v2276
    %2651 = vmatmul.bf16.gmra.mxu0 %v1755
    %v2652 = vpop.f32.mrf.mxu0
    %v2653 = vadd.f32 0.0, %v2652
    %v2654 = vpop.f32.mrf.mxu0
    %v2655 = vadd.f32 0.0, %v2654
    %2656 = vdwg.mxu0
    %2657 = vmatpush.bf16.msra.mxu0 %v2306
    %2658 = vmatpush.bf16.msra.mxu0 %v2304
    %2659 = vmatpush.bf16.msra.mxu0 %v2302
    %2660 = vmatpush.bf16.msra.mxu0 %v2300
    %2661 = vmatpush.bf16.msra.mxu0 %v2298
    %2662 = vmatpush.bf16.msra.mxu0 %v2296
    %2663 = vmatpush.bf16.msra.mxu0 %v2294
    %2664 = vmatpush.bf16.msra.mxu0 %v2292
    %2665 = vmatmul.bf16.gmra.mxu0 %v1756
    %v2666 = vpop.f32.mrf.mxu0
    %v2667 = vadd.f32 %v2653, %v2666
    %v2668 = vpop.f32.mrf.mxu0
    %v2669 = vadd.f32 %v2655, %v2668
    %2670 = vdwg.mxu0
    %2671 = vmatpush.bf16.msra.mxu0 %v2322
    %2672 = vmatpush.bf16.msra.mxu0 %v2320
    %2673 = vmatpush.bf16.msra.mxu0 %v2318
    %2674 = vmatpush.bf16.msra.mxu0 %v2316
    %2675 = vmatpush.bf16.msra.mxu0 %v2314
    %2676 = vmatpush.bf16.msra.mxu0 %v2312
    %2677 = vmatpush.bf16.msra.mxu0 %v2310
    %2678 = vmatpush.bf16.msra.mxu0 %v2308
    %2679 = vmatmul.bf16.gmra.mxu0 %v1757
    %v2680 = vpop.f32.mrf.mxu0
    %v2681 = vadd.f32 %v2667, %v2680
    %v2682 = vpop.f32.mrf.mxu0
    %v2683 = vadd.f32 %v2669, %v2682
    %2684 = vdwg.mxu0
    %2685 = vmatpush.bf16.msra.mxu0 %v2338
    %2686 = vmatpush.bf16.msra.mxu0 %v2336
    %2687 = vmatpush.bf16.msra.mxu0 %v2334
    %2688 = vmatpush.bf16.msra.mxu0 %v2332
    %2689 = vmatpush.bf16.msra.mxu0 %v2330
    %2690 = vmatpush.bf16.msra.mxu0 %v2328
    %2691 = vmatpush.bf16.msra.mxu0 %v2326
    %2692 = vmatpush.bf16.msra.mxu0 %v2324
    %2693 = vmatmul.bf16.gmra.mxu0 %v1758
    %v2694 = vpop.f32.mrf.mxu0
    %v2695 = vadd.f32 %v2681, %v2694
    %v2696 = vpop.f32.mrf.mxu0
    %v2697 = vadd.f32 %v2683, %v2696
    %2698 = vdwg.mxu0
    %2699 = vmatpush.bf16.msra.mxu0 %v2354
    %2700 = vmatpush.bf16.msra.mxu0 %v2352
    %2701 = vmatpush.bf16.msra.mxu0 %v2350
    %2702 = vmatpush.bf16.msra.mxu0 %v2348
    %2703 = vmatpush.bf16.msra.mxu0 %v2346
    %2704 = vmatpush.bf16.msra.mxu0 %v2344
    %2705 = vmatpush.bf16.msra.mxu0 %v2342
    %2706 = vmatpush.bf16.msra.mxu0 %v2340
    %2707 = vmatmul.bf16.gmra.mxu0 %v1759
    %v2708 = vpop.f32.mrf.mxu0
    %v2709 = vadd.f32 %v2695, %v2708
    %v2710 = vpop.f32.mrf.mxu0
    %v2711 = vadd.f32 %v2697, %v2710
    %2712 = vdwg.mxu0
    %2713 = vmatpush.bf16.msra.mxu0 %v2370
    %2714 = vmatpush.bf16.msra.mxu0 %v2368
    %2715 = vmatpush.bf16.msra.mxu0 %v2366
    %2716 = vmatpush.bf16.msra.mxu0 %v2364
    %2717 = vmatpush.bf16.msra.mxu0 %v2362
    %2718 = vmatpush.bf16.msra.mxu0 %v2360
    %2719 = vmatpush.bf16.msra.mxu0 %v2358
    %2720 = vmatpush.bf16.msra.mxu0 %v2356
    %2721 = vmatmul.bf16.gmra.mxu0 %v1760
    %v2722 = vpop.f32.mrf.mxu0
    %v2723 = vadd.f32 %v2709, %v2722
    %v2724 = vpop.f32.mrf.mxu0
    %v2725 = vadd.f32 %v2711, %v2724
    %2726 = vdwg.mxu0
    %2727 = vmatpush.bf16.msra.mxu0 %v2386
    %2728 = vmatpush.bf16.msra.mxu0 %v2384
    %2729 = vmatpush.bf16.msra.mxu0 %v2382
    %2730 = vmatpush.bf16.msra.mxu0 %v2380
    %2731 = vmatpush.bf16.msra.mxu0 %v2378
    %2732 = vmatpush.bf16.msra.mxu0 %v2376
    %2733 = vmatpush.bf16.msra.mxu0 %v2374
    %2734 = vmatpush.bf16.msra.mxu0 %v2372
    %2735 = vmatmul.bf16.gmra.mxu0 %v1761
    %v2736 = vpop.f32.mrf.mxu0
    %v2737 = vadd.f32 %v2723, %v2736
    %v2738 = vpop.f32.mrf.mxu0
    %v2739 = vadd.f32 %v2725, %v2738
    %2740 = vdwg.mxu0
    %2741 = vmatpush.bf16.msra.mxu0 %v2402
    %2742 = vmatpush.bf16.msra.mxu0 %v2400
    %2743 = vmatpush.bf16.msra.mxu0 %v2398
    %2744 = vmatpush.bf16.msra.mxu0 %v2396
    %2745 = vmatpush.bf16.msra.mxu0 %v2394
    %2746 = vmatpush.bf16.msra.mxu0 %v2392
    %2747 = vmatpush.bf16.msra.mxu0 %v2390
    %2748 = vmatpush.bf16.msra.mxu0 %v2388
    %2749 = vmatmul.bf16.gmra.mxu0 %v1762
    %v2750 = vpop.f32.mrf.mxu0
    %v2751 = vadd.f32 %v2737, %v2750
    %v2752 = vpop.f32.mrf.mxu0
    %v2753 = vadd.f32 %v2739, %v2752
    %2754 = vdwg.mxu0
    %p2755 = scmp.eq.s32.totalorder 0, 0
    // Predicated region
    $region22: #{mlp_forward.1} parent=1 // pred_check
      %p2756 = pneg %p2755
    $region23: #{mlp_forward.1} parent=1 // pred_check_branch
      %2758 = sbr.rel (%p2756) target = $region25
    $region24: #{mlp_forward.1} parent=1 // pred_region
      %2759 = vst [vmem:[#allocation2] sm:$0xff] %v2639
      %2760 = vst [vmem:[#allocation2 + $0x8] sm:$0xff] %v2751
      %2761 = vst [vmem:[#allocation2 + $0x10] sm:$0xff] %v2641
      %2762 = vst [vmem:[#allocation2 + $0x18] sm:$0xff] %v2753
    $region25: #{mlp_forward.1} parent=1 // pred_fallthru
      _
    %p2763 = scmp.gt.s32.totalorder 0, 0
    // Predicated region
    $region26: #{mlp_forward.1} parent=1 // pred_check
      %p2764 = pneg %p2763
    $region27: #{mlp_forward.1} parent=1 // pred_check_branch
      %2766 = sbr.rel (%p2764) target = $region29
    $region28: #{mlp_forward.1} parent=1 // pred_region
      %v2767 = vld [vmem:[#allocation2] sm:$0xff]
      %v2768 = vld [vmem:[#allocation2 + $0x8] sm:$0xff]
      %v2769 = vld [vmem:[#allocation2 + $0x10] sm:$0xff]
      %v2770 = vld [vmem:[#allocation2 + $0x18] sm:$0xff]
      %v2771 = vadd.f32 %v2767, %v2639
      %v2772 = vadd.f32 %v2768, %v2751
      %v2773 = vadd.f32 %v2769, %v2641
      %v2774 = vadd.f32 %v2770, %v2753
      %2775 = vst [vmem:[#allocation2] sm:$0xff] %v2771
      %2776 = vst [vmem:[#allocation2 + $0x8] sm:$0xff] %v2772
      %2777 = vst [vmem:[#allocation2 + $0x10] sm:$0xff] %v2773
      %2778 = vst [vmem:[#allocation2 + $0x18] sm:$0xff] %v2774
    $region29: #{mlp_forward.1} parent=1 // pred_fallthru
      _
    // Predicated region
    $region30: #{mlp_forward.1} parent=1 // pred_check
      %p2779 = pneg %p2755
    $region31: #{mlp_forward.1} parent=1 // pred_check_branch
      %2781 = sbr.rel (%p2779) target = $region33
    $region32: #{mlp_forward.1} parent=1 // pred_region
      %v2782 = vld [vmem:[#allocation2] sm:$0xff]
      %v2783 = vld [vmem:[#allocation2 + $0x8] sm:$0xff]
      %v2784 = vld [vmem:[#allocation2 + $0x10] sm:$0xff]
      %v2785 = vld [vmem:[#allocation2 + $0x18] sm:$0xff]
      %2786 = vst [vmem:[#allocation8] sm:$0xff] %v2782
      %2787 = vst [vmem:[#allocation8 + $0x8] sm:$0xff] %v2783
      %2788 = vst [vmem:[#allocation8 + $0x10] sm:$0xff] %v2784
      %2789 = vst [vmem:[#allocation8 + $0x18] sm:$0xff] %v2785
    $region33: #{mlp_forward.1} parent=1 // pred_fallthru
      _
    // Predicated region
    $region34: #{mlp_forward.1} parent=1 // pred_check
      _
    $region35: #{mlp_forward.1} parent=1 // pred_check_branch
      %2791 = sbr.rel (0) target = $region37
    $region36: #{mlp_forward.1} parent=1 // pred_region
      %2793 = vsyncadd [#allocation5], 0
      %s2794 = sshll.u32 [#allocation8], 4
      %s2795 = int_to_ptr.vmem [resolvable:$true] %s2794
      %s2796 = sshll.u32 %s3, 4
      %s2797 = int_to_ptr.hbm [resolvable:$true] %s2796
      %2802 = dma.vmem_to_hbm [thread:$0]  %s2795, 512, %s2797, [#allocation5], 256, 256, 16
    $region37: #{mlp_forward.1} parent=1 // pred_fallthru
      _
    // Predicated region
    $region38: #{mlp_forward.1} parent=1 // pred_check
      _
    $region39: #{mlp_forward.1} parent=1 // pred_check_branch
      %2804 = sbr.rel (0) target = $region41
    $region40: #{mlp_forward.1} parent=1 // pred_region
      %2806 = dma.done [#allocation5], 512
    $region41: #{mlp_forward.1} parent=1 // pred_fallthru
      _
    %2807 = vsyncpa [#allocation4], 1
    %2808 = vsyncpa [#allocation7], 1
    %2809 = vsyncpa [#allocation5], 1

</llo_original>
